<compile_context>
chip_gen: v7x
topology: tpu7x:2x2x1
jax: 0.10.0
libtpu: 0.0.40
codegen_flags: <defaults>
</compile_context>

<pallas_src>
import functools

import jax
import jax.numpy as jnp
from jax import lax
from jax.experimental import pallas as pl
from jax.experimental.pallas import tpu as pltpu


def birnn_kernel(lens_ref, embf_ref, embb_ref,
                 wih_f_ref, wih_b_ref, b_f_ref, b_b_ref,
                 whh_ref, wdec_ref, bdec_ref,
                 out_ref, hn_ref,
                 xcomb_sc, h_sc, cap_sc,
                 *, Tc, B, T):
    i = pl.program_id(0)
    nT = pl.num_programs(0)
    H = wih_f_ref.shape[1]

    @pl.when(i == 0)
    def _init():
        z = jnp.zeros((B, 2 * H), jnp.float32)
        h_sc[...] = z
        cap_sc[...] = z

    # ---- Hoisted input projections for the whole chunk: one big MXU matmul per
    # direction with the bias folded in.  Both halves land in a single (Tc*B, 2H)
    # scratch so the recurrence reads one lane-contiguous (B, 2H) slab per step. ----
    xcomb_sc[:, pl.ds(0, H)] = (
        jnp.dot(embf_ref[...], wih_f_ref[...], preferred_element_type=jnp.float32)
        + b_f_ref[...])
    xcomb_sc[:, pl.ds(H, H)] = (
        jnp.dot(embb_ref[...], wih_b_ref[...], preferred_element_type=jnp.float32)
        + b_b_ref[...])

    # Per-lane capture time: forward lanes capture at t = len-1; backward lanes (which
    # consume the time-reversed stream) capture at reversed index T-1-(len-1).
    last_idx = lens_ref[...] - 1                                    # (B, 1) int32
    lane_ge_h = lax.broadcasted_iota(jnp.int32, (B, 2 * H), 1) >= H
    target_t = jnp.where(lane_ge_h, (T - 1) - last_idx, last_idx)   # (B, 2H) int32

    whh = whh_ref[...]                  # (2H, 2H) block-diagonal [whh_f ; whh_b]
    h_dt = whh.dtype
    h = h_sc[...]                       # (B, 2H)  [h_fwd | h_bwd]
    cap = cap_sc[...]
    t0 = i * Tc

    # ---- Fully-unrolled fused fwd/bwd recurrence: one MXU matmul + one tanh (EUP)
    # + one compare/select (VPU) per step. ----
    for s in range(Tc):
        x = xcomb_sc[pl.ds(s * B, B), :]
        h = jnp.tanh(jnp.dot(h.astype(h_dt), whh,
                             preferred_element_type=jnp.float32) + x)
        cap = jnp.where(target_t == t0 + s, h, cap)

    h_sc[...] = h
    cap_sc[...] = cap

    @pl.when(i == nT - 1)
    def _finalize():
        # cap is already [fwd | bwd] in PyTorch's concat order -> single decoder matmul.
        out_ref[...] = (
            jnp.dot(cap.astype(wdec_ref.dtype), wdec_ref[...],
                    preferred_element_type=jnp.float32)
            + bdec_ref[...])
        hn_ref[0, :, :] = h[:, :H]
        hn_ref[1, :, :] = h[:, H:]


def _pick_time_chunk(T, B, target):
    """Largest divisor of T that is <= target and keeps the emb block's sublane
    dim (Tc*B) a multiple of 8 (or covers the full time axis)."""
    for c in range(min(target, T), 0, -1):
        if T % c == 0 and ((c * B) % 8 == 0 or c == T):
            return c
    return T


def birnn_forward(tokens, seq_lengths, params, *, time_chunk=4,
                  matmul_dtype=jnp.float32):
    emb_tab = params["embedding"]
    B, T = tokens.shape
    E = emb_tab.shape[1]
    H = params["whh_f"].shape[0]
    O = params["wdec"].shape[1]

    Tc = _pick_time_chunk(T, B, time_chunk)
    nT = T // Tc
    row_blk = Tc * B

    # Glue: embedding gather + time-major flatten -> (T*B, E).  The backward stream is
    # materialized time-reversed so both directions read their chunks with the same
    # trivial index_map.
    # TODO(synk): the row-gather could be moved in-kernel via scalar-prefetched token
    # ids + per-row DMA to avoid materializing the embedded sequence in HBM.
    emb = jnp.take(emb_tab, tokens, axis=0)                          # (B, T, E)
    emb_tm = jnp.transpose(emb, (1, 0, 2)).astype(matmul_dtype)      # (T, B, E)
    embf2d = emb_tm.reshape(T * B, E)                                # forward stream
    embb2d = emb_tm[::-1].reshape(T * B, E)                          # reversed stream
    lens2d = seq_lengths.reshape(B, 1).astype(jnp.int32)

    wih_f = params["wih_f"].astype(matmul_dtype)
    wih_b = params["wih_b"].astype(matmul_dtype)
    # Block-diagonal hidden-to-hidden weight: one fused matmul advances both directions.
    whh = jnp.zeros((2 * H, 2 * H), jnp.float32)
    whh = whh.at[:H, :H].set(params["whh_f"]).at[H:, H:].set(params["whh_b"])
    whh = whh.astype(matmul_dtype)
    wdec = params["wdec"].astype(matmul_dtype)
    b_f = params["b_f"].astype(jnp.float32)
    b_b = params["b_b"].astype(jnp.float32)
    bdec = params["bdec"].astype(jnp.float32)

    def const_spec(shape):
        zeros = (0,) * len(shape)
        return pl.BlockSpec(shape, lambda i, _z=zeros: _z)

    in_specs = [
        const_spec((B, 1)),
        pl.BlockSpec((row_blk, E), lambda i: (i, 0)),     # forward time chunk
        pl.BlockSpec((row_blk, E), lambda i: (i, 0)),     # reversed-time chunk
        const_spec(wih_f.shape), const_spec(wih_b.shape),
        const_spec(b_f.shape), const_spec(b_b.shape),
        const_spec(whh.shape), const_spec(wdec.shape), const_spec(bdec.shape),
    ]
    out_shape = (jax.ShapeDtypeStruct((B, O), jnp.float32),
                 jax.ShapeDtypeStruct((2, B, H), jnp.float32))
    out_specs = (pl.BlockSpec((B, O), lambda i: (0, 0)),
                 pl.BlockSpec((2, B, H), lambda i: (0, 0, 0)))

    scratch_shapes = [
        pltpu.VMEM((row_blk, 2 * H), jnp.float32),   # fused hoisted input projections
        pltpu.VMEM((B, 2 * H), jnp.float32),         # [h_fwd | h_bwd] carry
        pltpu.VMEM((B, 2 * H), jnp.float32),         # captured state at len-1
    ]

    kernel = functools.partial(birnn_kernel, Tc=Tc, B=B, T=T)
    out_final, h_n = pl.pallas_call(
        kernel,
        grid=(nT,),
        in_specs=in_specs,
        out_specs=out_specs,
        out_shape=out_shape,
        scratch_shapes=scratch_shapes,
        compiler_params=pltpu.CompilerParams(
            dimension_semantics=("arbitrary",),      # time axis carries the recurrence
            vmem_limit_bytes=32 * 1024 * 1024),
    )(lens2d, embf2d, embb2d, wih_f, wih_b, b_f, b_b, whh, wdec, bdec)
    return out_final, h_n


def birnn_reference(tokens, seq_lengths, params):
    """Pure-JAX reference matching PyTorch nn.RNN(bidirectional=True) semantics."""
    emb = jnp.take(params["embedding"], tokens, axis=0)   # (B, T, E)
    xs = jnp.transpose(emb, (1, 0, 2))                    # (T, B, E)

    def run_dir(wih, whh, b, xs_dir):
        Bd = xs_dir.shape[1]
        Hd = whh.shape[0]

        def scan_fn(h, x_t):
            h_new = jnp.tanh(x_t @ wih + h @ whh + b)
            return h_new, h_new

        h0 = jnp.zeros((Bd, Hd), jnp.float32)
        h_last, hs = jax.lax.scan(scan_fn, h0, xs_dir)
        return h_last, hs

    hf_last, hf_seq = run_dir(params["wih_f"], params["whh_f"], params["b_f"], xs)
    hb_last, hb_rev = run_dir(params["wih_b"], params["whh_b"], params["b_b"], xs[::-1])
    hb_seq = hb_rev[::-1]

    out = jnp.concatenate([hf_seq, hb_seq], axis=-1)      # (T, B, 2H)
    out = jnp.transpose(out, (1, 0, 2))                   # (B, T, 2H)
    idx = seq_lengths - 1
    out_real = out[jnp.arange(out.shape[0]), idx, :]
    out_final = out_real @ params["wdec"] + params["bdec"]
    h_n = jnp.stack([hf_last, hb_last], axis=0)
    return out_final, h_n


def init_params(key, vocab_size, embedding_dim, hidden_size, output_size):
    ks = jax.random.split(key, 12)
    k_rnn = 1.0 / float(hidden_size) ** 0.5
    k_dec = 1.0 / float(2 * hidden_size) ** 0.5

    def u(k, shape, lim):
        return jax.random.uniform(k, shape, jnp.float32, -lim, lim)

    emb = jax.random.normal(ks[0], (vocab_size, embedding_dim), jnp.float32)
    emb = emb.at[0].set(0.0)                              # padding_idx = 0

    return dict(
        embedding=emb,
        wih_f=u(ks[1], (embedding_dim, hidden_size), k_rnn),
        whh_f=u(ks[2], (hidden_size, hidden_size), k_rnn),
        b_f=u(ks[3], (1, hidden_size), k_rnn) + u(ks[4], (1, hidden_size), k_rnn),
        wih_b=u(ks[5], (embedding_dim, hidden_size), k_rnn),
        whh_b=u(ks[6], (hidden_size, hidden_size), k_rnn),
        b_b=u(ks[7], (1, hidden_size), k_rnn) + u(ks[8], (1, hidden_size), k_rnn),
        wdec=u(ks[9], (2 * hidden_size, output_size), k_dec),
        bdec=u(ks[10], (1, output_size), k_dec),
    )


if __name__ == "__main__":
    vocab_size, embedding_dim, hidden_size, output_size = 50, 32, 32, 4
    B, T = 2, 8

    key = jax.random.PRNGKey(0)
    kp, kt = jax.random.split(key)
    params = init_params(kp, vocab_size, embedding_dim, hidden_size, output_size)

    seq_lengths = jnp.array([8, 5], dtype=jnp.int32)
    tokens = jax.random.randint(kt, (B, T), 1, vocab_size, dtype=jnp.int32)
    valid = jnp.arange(T)[None, :] < seq_lengths[:, None]
    tokens = jnp.where(valid, tokens, 0)                  # pad with padding_idx 0

    out_final, h_n = birnn_forward(tokens, seq_lengths, params)
    jax.block_until_ready((out_final, h_n))

    ref_out, ref_hn = birnn_reference(tokens, seq_lengths, params)
    assert out_final.shape == (B, output_size)
    assert h_n.shape == (2, B, hidden_size)
    assert jnp.allclose(out_final, ref_out, atol=1e-5), "decoder output mismatch"
    assert jnp.allclose(h_n, ref_hn, atol=1e-5), "h_n mismatch"

    print("KERNEL_OK")
</pallas_src>

<mosaic_0001>
module attributes {stable_mosaic.version = 11 : i64} {
  func.func @birnn_kernel(%arg0: i32, %arg1: memref<2x1xi32, #tpu.memory_space<vmem>>, %arg2: memref<8x32xf32, #tpu.memory_space<vmem>>, %arg3: memref<8x32xf32, #tpu.memory_space<vmem>>, %arg4: memref<32x32xf32, #tpu.memory_space<vmem>>, %arg5: memref<32x32xf32, #tpu.memory_space<vmem>>, %arg6: memref<1x32xf32, #tpu.memory_space<vmem>>, %arg7: memref<1x32xf32, #tpu.memory_space<vmem>>, %arg8: memref<64x64xf32, #tpu.memory_space<vmem>>, %arg9: memref<64x4xf32, #tpu.memory_space<vmem>>, %arg10: memref<1x4xf32, #tpu.memory_space<vmem>>, %arg11: memref<2x4xf32, #tpu.memory_space<vmem>>, %arg12: memref<2x2x32xf32, #tpu.memory_space<vmem>>, %arg13: memref<8x64xf32, #tpu.memory_space<vmem>>, %arg14: memref<2x64xf32, #tpu.memory_space<vmem>>, %arg15: memref<2x64xf32, #tpu.memory_space<vmem>>) attributes {dimension_semantics = [#tpu.dimension_semantics<arbitrary>], iteration_bounds = array<i64: 2>, scalar_prefetch = 0 : i64, scratch_operands = 3 : i64, tpu.core_type = #tpu.core_type<tc>, window_params = [{pipeline_mode = #tpu.pipeline_mode<synchronous>, transform_indices = @transform_0, window_bounds = array<i64: 2, 1>}, {transform_indices = @transform_1, window_bounds = array<i64: 8, 32>}, {transform_indices = @transform_2, window_bounds = array<i64: 8, 32>}, {pipeline_mode = #tpu.pipeline_mode<synchronous>, transform_indices = @transform_3, window_bounds = array<i64: 32, 32>}, {pipeline_mode = #tpu.pipeline_mode<synchronous>, transform_indices = @transform_4, window_bounds = array<i64: 32, 32>}, {pipeline_mode = #tpu.pipeline_mode<synchronous>, transform_indices = @transform_5, window_bounds = array<i64: 1, 32>}, {pipeline_mode = #tpu.pipeline_mode<synchronous>, transform_indices = @transform_6, window_bounds = array<i64: 1, 32>}, {pipeline_mode = #tpu.pipeline_mode<synchronous>, transform_indices = @transform_7, window_bounds = array<i64: 64, 64>}, {pipeline_mode = #tpu.pipeline_mode<synchronous>, transform_indices = @transform_8, window_bounds = array<i64: 64, 4>}, {pipeline_mode = #tpu.pipeline_mode<synchronous>, transform_indices = @transform_9, window_bounds = array<i64: 1, 4>}, {pipeline_mode = #tpu.pipeline_mode<synchronous>, transform_indices = @transform_10, window_bounds = array<i64: 2, 4>}, {pipeline_mode = #tpu.pipeline_mode<synchronous>, transform_indices = @transform_11, window_bounds = array<i64: 2, 2, 32>}]} {
    %c0_i32 = arith.constant 0 : i32
    %0 = arith.cmpi eq, %arg0, %c0_i32 : i32
    %1 = arith.extui %0 : i1 to i32
    %c0_i32_0 = arith.constant 0 : i32
    %2 = arith.cmpi ne, %1, %c0_i32_0 : i32
    scf.if %2 {
      %cst_41 = arith.constant 0.000000e+00 : f32
      %71 = vector.broadcast %cst_41 : f32 to vector<2x64xf32>
      %c0_42 = arith.constant 0 : index
      %c0_43 = arith.constant 0 : index
      %72 = vector.load %arg14[%c0_42, %c0_43] : memref<2x64xf32, #tpu.memory_space<vmem>>, vector<2x64xf32>
      tpu.vector_store %arg14[%c0_42, %c0_43], %71 {strides = array<i32>} : memref<2x64xf32, #tpu.memory_space<vmem>>, vector<2x64xf32>,
      %c0_44 = arith.constant 0 : index
      %c0_45 = arith.constant 0 : index
      %73 = vector.load %arg15[%c0_44, %c0_45] : memref<2x64xf32, #tpu.memory_space<vmem>>, vector<2x64xf32>
      tpu.vector_store %arg15[%c0_44, %c0_45], %71 {strides = array<i32>} : memref<2x64xf32, #tpu.memory_space<vmem>>, vector<2x64xf32>,
    } else {
    }
    %c0 = arith.constant 0 : index
    %c0_1 = arith.constant 0 : index
    %3 = vector.load %arg2[%c0, %c0_1] : memref<8x32xf32, #tpu.memory_space<vmem>>, vector<8x32xf32>
    %c0_2 = arith.constant 0 : index
    %c0_3 = arith.constant 0 : index
    %4 = vector.load %arg4[%c0_2, %c0_3] : memref<32x32xf32, #tpu.memory_space<vmem>>, vector<32x32xf32>
    %cst = arith.constant dense<0.000000e+00> : vector<8x32xf32>
    %5 = tpu.matmul %3, %4, %cst {dimension_numbers = #tpu.dot_dimension_numbers<[1], [0], [0], [1], [0, 0, 1, 1], [], []>} : vector<8x32xf32>, vector<32x32xf32>, vector<8x32xf32> -> vector<8x32xf32>
    %c0_4 = arith.constant 0 : index
    %c0_5 = arith.constant 0 : index
    %6 = vector.load %arg6[%c0_4, %c0_5] : memref<1x32xf32, #tpu.memory_space<vmem>>, vector<1x32xf32>
    %7 = vector.broadcast %6 : vector<1x32xf32> to vector<8x32xf32>
    %8 = arith.addf %5, %7 : vector<8x32xf32>
    %c0_6 = arith.constant 0 : index
    %c0_7 = arith.constant 0 : index
    %9 = vector.load %arg13[%c0_6, %c0_7] : memref<8x64xf32, #tpu.memory_space<vmem>>, vector<8x32xf32>
    tpu.vector_store %arg13[%c0_6, %c0_7], %8 {strides = array<i32>} : memref<8x64xf32, #tpu.memory_space<vmem>>, vector<8x32xf32>,
    %c0_8 = arith.constant 0 : index
    %c0_9 = arith.constant 0 : index
    %10 = vector.load %arg3[%c0_8, %c0_9] : memref<8x32xf32, #tpu.memory_space<vmem>>, vector<8x32xf32>
    %c0_10 = arith.constant 0 : index
    %c0_11 = arith.constant 0 : index
    %11 = vector.load %arg5[%c0_10, %c0_11] : memref<32x32xf32, #tpu.memory_space<vmem>>, vector<32x32xf32>
    %cst_12 = arith.constant dense<0.000000e+00> : vector<8x32xf32>
    %12 = tpu.matmul %10, %11, %cst_12 {dimension_numbers = #tpu.dot_dimension_numbers<[1], [0], [0], [1], [0, 0, 1, 1], [], []>} : vector<8x32xf32>, vector<32x32xf32>, vector<8x32xf32> -> vector<8x32xf32>
    %c0_13 = arith.constant 0 : index
    %c0_14 = arith.constant 0 : index
    %13 = vector.load %arg7[%c0_13, %c0_14] : memref<1x32xf32, #tpu.memory_space<vmem>>, vector<1x32xf32>
    %14 = vector.broadcast %13 : vector<1x32xf32> to vector<8x32xf32>
    %15 = arith.addf %12, %14 : vector<8x32xf32>
    %c0_15 = arith.constant 0 : index
    %c32 = arith.constant 32 : index
    %16 = vector.load %arg13[%c0_15, %c32] : memref<8x64xf32, #tpu.memory_space<vmem>>, vector<8x32xf32>
    tpu.vector_store %arg13[%c0_15, %c32], %15 {strides = array<i32>} : memref<8x64xf32, #tpu.memory_space<vmem>>, vector<8x32xf32>,
    %c0_16 = arith.constant 0 : index
    %c0_17 = arith.constant 0 : index
    %17 = vector.load %arg1[%c0_16, %c0_17] : memref<2x1xi32, #tpu.memory_space<vmem>>, vector<2x1xi32>
    %c1_i32 = arith.constant 1 : i32
    %18 = vector.broadcast %c1_i32 : i32 to vector<2x1xi32>
    %19 = arith.subi %17, %18 : vector<2x1xi32>
    %20 = tpu.iota {dimensions = array<i32: 1>} : vector<2x64xi32>
    %c32_i32 = arith.constant 32 : i32
    %21 = vector.broadcast %c32_i32 : i32 to vector<2x64xi32>
    %22 = arith.cmpi sge, %20, %21 : vector<2x64xi32>
    %c7_i32 = arith.constant 7 : i32
    %23 = vector.broadcast %c7_i32 : i32 to vector<2x1xi32>
    %24 = arith.subi %23, %19 : vector<2x1xi32>
    %25 = vector.shape_cast %24 : vector<2x1xi32> to vector<2x1xi32>
    %26 = vector.broadcast %25 : vector<2x1xi32> to vector<2x64xi32>
    %27 = vector.shape_cast %19 : vector<2x1xi32> to vector<2x1xi32>
    %28 = vector.broadcast %27 : vector<2x1xi32> to vector<2x64xi32>
    %29 = arith.select %22, %26, %28 : vector<2x64xi1>, vector<2x64xi32>
    %c0_18 = arith.constant 0 : index
    %c0_19 = arith.constant 0 : index
    %30 = vector.load %arg8[%c0_18, %c0_19] : memref<64x64xf32, #tpu.memory_space<vmem>>, vector<64x64xf32>
    %c0_20 = arith.constant 0 : index
    %c0_21 = arith.constant 0 : index
    %31 = vector.load %arg14[%c0_20, %c0_21] : memref<2x64xf32, #tpu.memory_space<vmem>>, vector<2x64xf32>
    %c0_22 = arith.constant 0 : index
    %c0_23 = arith.constant 0 : index
    %32 = vector.load %arg15[%c0_22, %c0_23] : memref<2x64xf32, #tpu.memory_space<vmem>>, vector<2x64xf32>
    %c4_i32 = arith.constant 4 : i32
    %33 = arith.muli %arg0, %c4_i32 : i32
    %c0_24 = arith.constant 0 : index
    %c0_25 = arith.constant 0 : index
    %34 = vector.load %arg13[%c0_24, %c0_25] : memref<8x64xf32, #tpu.memory_space<vmem>>, vector<2x64xf32>
    %cst_26 = arith.constant dense<0.000000e+00> : vector<2x64xf32>
    %35 = tpu.matmul %31, %30, %cst_26 {dimension_numbers = #tpu.dot_dimension_numbers<[1], [0], [0], [1], [0, 0, 1, 1], [], []>} : vector<2x64xf32>, vector<64x64xf32>, vector<2x64xf32> -> vector<2x64xf32>
    %36 = arith.addf %35, %34 : vector<2x64xf32>
    %37 = math.tanh %36 : vector<2x64xf32>
    %c0_i32_27 = arith.constant 0 : i32
    %38 = arith.addi %33, %c0_i32_27 : i32
    %39 = vector.broadcast %38 : i32 to vector<2x64xi32>
    %40 = arith.cmpi eq, %29, %39 : vector<2x64xi32>
    %41 = arith.select %40, %37, %32 : vector<2x64xi1>, vector<2x64xf32>
    %c2 = arith.constant 2 : index
    %c0_28 = arith.constant 0 : index
    %42 = vector.load %arg13[%c2, %c0_28] : memref<8x64xf32, #tpu.memory_space<vmem>>, vector<2x64xf32>
    %cst_29 = arith.constant dense<0.000000e+00> : vector<2x64xf32>
    %43 = tpu.matmul %37, %30, %cst_29 {dimension_numbers = #tpu.dot_dimension_numbers<[1], [0], [0], [1], [0, 0, 1, 1], [], []>} : vector<2x64xf32>, vector<64x64xf32>, vector<2x64xf32> -> vector<2x64xf32>
    %44 = arith.addf %43, %42 : vector<2x64xf32>
    %45 = math.tanh %44 : vector<2x64xf32>
    %c1_i32_30 = arith.constant 1 : i32
    %46 = arith.addi %33, %c1_i32_30 : i32
    %47 = vector.broadcast %46 : i32 to vector<2x64xi32>
    %48 = arith.cmpi eq, %29, %47 : vector<2x64xi32>
    %49 = arith.select %48, %45, %41 : vector<2x64xi1>, vector<2x64xf32>
    %c4 = arith.constant 4 : index
    %c0_31 = arith.constant 0 : index
    %50 = vector.load %arg13[%c4, %c0_31] : memref<8x64xf32, #tpu.memory_space<vmem>>, vector<2x64xf32>
    %cst_32 = arith.constant dense<0.000000e+00> : vector<2x64xf32>
    %51 = tpu.matmul %45, %30, %cst_32 {dimension_numbers = #tpu.dot_dimension_numbers<[1], [0], [0], [1], [0, 0, 1, 1], [], []>} : vector<2x64xf32>, vector<64x64xf32>, vector<2x64xf32> -> vector<2x64xf32>
    %52 = arith.addf %51, %50 : vector<2x64xf32>
    %53 = math.tanh %52 : vector<2x64xf32>
    %c2_i32 = arith.constant 2 : i32
    %54 = arith.addi %33, %c2_i32 : i32
    %55 = vector.broadcast %54 : i32 to vector<2x64xi32>
    %56 = arith.cmpi eq, %29, %55 : vector<2x64xi32>
    %57 = arith.select %56, %53, %49 : vector<2x64xi1>, vector<2x64xf32>
    %c6 = arith.constant 6 : index
    %c0_33 = arith.constant 0 : index
    %58 = vector.load %arg13[%c6, %c0_33] : memref<8x64xf32, #tpu.memory_space<vmem>>, vector<2x64xf32>
    %cst_34 = arith.constant dense<0.000000e+00> : vector<2x64xf32>
    %59 = tpu.matmul %53, %30, %cst_34 {dimension_numbers = #tpu.dot_dimension_numbers<[1], [0], [0], [1], [0, 0, 1, 1], [], []>} : vector<2x64xf32>, vector<64x64xf32>, vector<2x64xf32> -> vector<2x64xf32>
    %60 = arith.addf %59, %58 : vector<2x64xf32>
    %61 = math.tanh %60 : vector<2x64xf32>
    %c3_i32 = arith.constant 3 : i32
    %62 = arith.addi %33, %c3_i32 : i32
    %63 = vector.broadcast %62 : i32 to vector<2x64xi32>
    %64 = arith.cmpi eq, %29, %63 : vector<2x64xi32>
    %65 = arith.select %64, %61, %57 : vector<2x64xi1>, vector<2x64xf32>
    %c0_35 = arith.constant 0 : index
    %c0_36 = arith.constant 0 : index
    %66 = vector.load %arg14[%c0_35, %c0_36] : memref<2x64xf32, #tpu.memory_space<vmem>>, vector<2x64xf32>
    tpu.vector_store %arg14[%c0_35, %c0_36], %61 {strides = array<i32>} : memref<2x64xf32, #tpu.memory_space<vmem>>, vector<2x64xf32>,
    %c0_37 = arith.constant 0 : index
    %c0_38 = arith.constant 0 : index
    %67 = vector.load %arg15[%c0_37, %c0_38] : memref<2x64xf32, #tpu.memory_space<vmem>>, vector<2x64xf32>
    tpu.vector_store %arg15[%c0_37, %c0_38], %65 {strides = array<i32>} : memref<2x64xf32, #tpu.memory_space<vmem>>, vector<2x64xf32>,
    %c1_i32_39 = arith.constant 1 : i32
    %68 = arith.cmpi eq, %arg0, %c1_i32_39 : i32
    %69 = arith.extui %68 : i1 to i32
    %c0_i32_40 = arith.constant 0 : i32
    %70 = arith.cmpi ne, %69, %c0_i32_40 : i32
    scf.if %70 {
      %c0_41 = arith.constant 0 : index
      %c0_42 = arith.constant 0 : index
      %71 = vector.load %arg9[%c0_41, %c0_42] : memref<64x4xf32, #tpu.memory_space<vmem>>, vector<64x4xf32>
      %cst_43 = arith.constant dense<0.000000e+00> : vector<2x4xf32>
      %72 = tpu.matmul %65, %71, %cst_43 {dimension_numbers = #tpu.dot_dimension_numbers<[1], [0], [0], [1], [0, 0, 1, 1], [], []>} : vector<2x64xf32>, vector<64x4xf32>, vector<2x4xf32> -> vector<2x4xf32>
      %c0_44 = arith.constant 0 : index
      %c0_45 = arith.constant 0 : index
      %73 = vector.load %arg10[%c0_44, %c0_45] : memref<1x4xf32, #tpu.memory_space<vmem>>, vector<1x4xf32>
      %74 = vector.broadcast %73 : vector<1x4xf32> to vector<2x4xf32>
      %75 = arith.addf %72, %74 : vector<2x4xf32>
      %c0_46 = arith.constant 0 : index
      %c0_47 = arith.constant 0 : index
      %76 = vector.load %arg11[%c0_46, %c0_47] : memref<2x4xf32, #tpu.memory_space<vmem>>, vector<2x4xf32>
      tpu.vector_store %arg11[%c0_46, %c0_47], %75 {strides = array<i32>} : memref<2x4xf32, #tpu.memory_space<vmem>>, vector<2x4xf32>,
      %77 = vector.extract_strided_slice %61 {offsets = [0, 0], sizes = [2, 32], strides = [1, 1]} : vector<2x64xf32> to vector<2x32xf32>
      %c0_48 = arith.constant 0 : index
      %c0_49 = arith.constant 0 : index
      %c0_50 = arith.constant 0 : index
      %78 = vector.load %arg12[%c0_48, %c0_49, %c0_50] : memref<2x2x32xf32, #tpu.memory_space<vmem>>, vector<1x2x32xf32>
      %79 = vector.shape_cast %78 : vector<1x2x32xf32> to vector<2x32xf32>
      %80 = vector.shape_cast %77 : vector<2x32xf32> to vector<1x2x32xf32>
      tpu.vector_store %arg12[%c0_48, %c0_49, %c0_50], %80 {strides = array<i32>} : memref<2x2x32xf32, #tpu.memory_space<vmem>>, vector<1x2x32xf32>,
      %81 = vector.extract_strided_slice %61 {offsets = [0, 32], sizes = [2, 32], strides = [1, 1]} : vector<2x64xf32> to vector<2x32xf32>
      %c1 = arith.constant 1 : index
      %c0_51 = arith.constant 0 : index
      %c0_52 = arith.constant 0 : index
      %82 = vector.load %arg12[%c1, %c0_51, %c0_52] : memref<2x2x32xf32, #tpu.memory_space<vmem>>, vector<1x2x32xf32>
      %83 = vector.shape_cast %82 : vector<1x2x32xf32> to vector<2x32xf32>
      %84 = vector.shape_cast %81 : vector<2x32xf32> to vector<1x2x32xf32>
      tpu.vector_store %arg12[%c1, %c0_51, %c0_52], %84 {strides = array<i32>} : memref<2x2x32xf32, #tpu.memory_space<vmem>>, vector<1x2x32xf32>,
    } else {
    }
    return
  }
  func.func @transform_0(%arg0: i32) -> (i32, i32) {
    %c0_i32 = arith.constant 0 : i32
    %c0_i32_0 = arith.constant 0 : i32
    %c0_i32_1 = arith.constant 0 : i32
    return %c0_i32, %c0_i32_0 : i32, i32
  }
  func.func @transform_1(%arg0: i32) -> (i32, i32) {
    %c0_i32 = arith.constant 0 : i32
    %c0_i32_0 = arith.constant 0 : i32
    return %arg0, %c0_i32 : i32, i32
  }
  func.func @transform_2(%arg0: i32) -> (i32, i32) {
    %c0_i32 = arith.constant 0 : i32
    %c0_i32_0 = arith.constant 0 : i32
    return %arg0, %c0_i32 : i32, i32
  }
  func.func @transform_3(%arg0: i32) -> (i32, i32) {
    %c0_i32 = arith.constant 0 : i32
    %c0_i32_0 = arith.constant 0 : i32
    %c0_i32_1 = arith.constant 0 : i32
    return %c0_i32, %c0_i32_0 : i32, i32
  }
  func.func @transform_4(%arg0: i32) -> (i32, i32) {
    %c0_i32 = arith.constant 0 : i32
    %c0_i32_0 = arith.constant 0 : i32
    %c0_i32_1 = arith.constant 0 : i32
    return %c0_i32, %c0_i32_0 : i32, i32
  }
  func.func @transform_5(%arg0: i32) -> (i32, i32) {
    %c0_i32 = arith.constant 0 : i32
    %c0_i32_0 = arith.constant 0 : i32
    %c0_i32_1 = arith.constant 0 : i32
    return %c0_i32, %c0_i32_0 : i32, i32
  }
  func.func @transform_6(%arg0: i32) -> (i32, i32) {
    %c0_i32 = arith.constant 0 : i32
    %c0_i32_0 = arith.constant 0 : i32
    %c0_i32_1 = arith.constant 0 : i32
    return %c0_i32, %c0_i32_0 : i32, i32
  }
  func.func @transform_7(%arg0: i32) -> (i32, i32) {
    %c0_i32 = arith.constant 0 : i32
    %c0_i32_0 = arith.constant 0 : i32
    %c0_i32_1 = arith.constant 0 : i32
    return %c0_i32, %c0_i32_0 : i32, i32
  }
  func.func @transform_8(%arg0: i32) -> (i32, i32) {
    %c0_i32 = arith.constant 0 : i32
    %c0_i32_0 = arith.constant 0 : i32
    %c0_i32_1 = arith.constant 0 : i32
    return %c0_i32, %c0_i32_0 : i32, i32
  }
  func.func @transform_9(%arg0: i32) -> (i32, i32) {
    %c0_i32 = arith.constant 0 : i32
    %c0_i32_0 = arith.constant 0 : i32
    %c0_i32_1 = arith.constant 0 : i32
    return %c0_i32, %c0_i32_0 : i32, i32
  }
  func.func @transform_10(%arg0: i32) -> (i32, i32) {
    %c0_i32 = arith.constant 0 : i32
    %c0_i32_0 = arith.constant 0 : i32
    %c0_i32_1 = arith.constant 0 : i32
    return %c0_i32, %c0_i32_0 : i32, i32
  }
  func.func @transform_11(%arg0: i32) -> (i32, i32, i32) {
    %c0_i32 = arith.constant 0 : i32
    %c0_i32_0 = arith.constant 0 : i32
    %c0_i32_1 = arith.constant 0 : i32
    %c0_i32_2 = arith.constant 0 : i32
    return %c0_i32, %c0_i32_0, %c0_i32_1 : i32, i32, i32
  }
}

</mosaic_0001>

<llo_original>
// kernel: tpu_custom_call.1
$region0: #{tpu_custom_call.1}
  #allocation0 [shape = 'u32[]', space=smem, size = 0x4, offset = 0x4, fixed_abs, tag = 'smem constant byte address 0x4 - core index']
  #allocation1 [shape = 'u32[144,128]{1,0:T(1,128)}', space=vmem, size = 0x12000, scoped, tag = 'internal scratch']
  #allocation2 [shape = 'f32[8,64]{1,0:T(8,128)}', space=vmem, size = 0x1000, scoped, tag = 'scratch operand']
  #allocation3 [shape = 'f32[2,64]{1,0:T(2,128)}', space=vmem, size = 0x400, scoped, tag = 'scratch operand']
  #allocation4 [shape = 'f32[2,64]{1,0:T(2,128)}', space=vmem, size = 0x400, scoped, tag = 'scratch operand']
  %s0 = inlined_call_operand.vmem [shape: s32[2,1], index: 0, kind: input, shape index: {}]
  %s1 = inlined_call_operand.hbm [shape: f32[16,32], index: 1, kind: input, shape index: {}]
  %s2 = inlined_call_operand.hbm [shape: f32[16,32], index: 2, kind: input, shape index: {}]
  %s3 = inlined_call_operand.vmem [shape: f32[32,32], index: 3, kind: input, shape index: {}]
  %s4 = inlined_call_operand.hbm [shape: f32[32,32], index: 4, kind: input, shape index: {}]
  %s5 = inlined_call_operand.vmem [shape: f32[1,32], index: 5, kind: input, shape index: {}]
  %s6 = inlined_call_operand.vmem [shape: f32[1,32], index: 6, kind: input, shape index: {}]
  %s7 = inlined_call_operand.vmem [shape: f32[64,64], index: 7, kind: input, shape index: {}]
  %s8 = inlined_call_operand.vmem [shape: f32[64,4], index: 8, kind: input, shape index: {}]
  %s9 = inlined_call_operand.vmem [shape: f32[1,4], index: 9, kind: input, shape index: {}]
  %s10 = inlined_call_operand.hbm [shape: f32[2,4], index: 10, kind: output, shape index: {0}]
  %s11 = inlined_call_operand.hbm [shape: f32[2,2,32], index: 11, kind: output, shape index: {1}]
  %12 = xla_tuple %s10, %s11
  %s13 = sld [smem:[#allocation0]]
  $region101: #{tpu_custom_call.1} parent=0
    _
  %s15 = ssub.s32 1, %s13
  %s16 = scalar_select 0, %s15, %s13
  $region1: #{tpu_custom_call.1} parent=0
    #allocation5 [shape = 'u8[8192]{0}', space=vmem, size = 0x2000, scoped, tag = 'input window, operand 1']
    #allocation6 [shape = 's32[2]{0}', space=sflag, size = 0x8, scoped, tag = 'scoped memory for tpu_custom_call.1']
    #allocation7 [shape = 's32[2]{0}', space=sflag, size = 0x8, scoped, tag = 'scoped memory for tpu_custom_call.1']
    #allocation8 [shape = 'u8[8192]{0}', space=vmem, size = 0x2000, scoped, tag = 'input window, operand 2']
    #allocation9 [shape = 's32[2]{0}', space=sflag, size = 0x8, scoped, tag = 'scoped memory for tpu_custom_call.1']
    #allocation10 [shape = 'u8[16384]{0}', space=vmem, size = 0x4000, scoped, tag = 'input window, operand 4, single buffered']
    #allocation11 [shape = 'u8[1024]{0}', space=vmem, size = 0x400, scoped, tag = 'output window, operand 0, single buffered']
    #allocation12 [shape = 'u8[2048]{0}', space=vmem, size = 0x800, scoped, tag = 'output window, operand 1, single buffered']
    #allocation13 [shape = 's32[1]{0}', space=sflag, size = 0x4, scoped, tag = 'scoped memory for tpu_custom_call.1']
    %17 = vsyncpa [#allocation6], 0
    %s18 = scalar_lea.sflag [#allocation6], 1
    %19 = vsyncpa %s18, 0
    %20 = vsyncpa [#allocation9], 0
    %s21 = scalar_lea.sflag [#allocation9], 1
    %22 = vsyncpa %s21, 0
    %23 = vsyncpa [#allocation7], 0
    %24 = vsyncpa [#allocation13], 0
    loop: start=0, step=1, limit=4
    $region2: #{tpu_custom_call.1} parent=1 // loop_pre_header
      _
    $region3: #{tpu_custom_call.1} parent=1 // loop_header
      %s26 = sphi 0, %s30
      %p27 = scmp.ge.s32.totalorder %s26, 4
      %s34 = sphi 0, %s34
      %s36 = sphi 0, %s34
      %s37 = sphi 0, %s36
      %s51 = sphi 0, %s37
      %s57 = sphi 0, %s59
      %s60 = sphi 0, %s57
      %s61 = sphi 0, %s60
      %s77 = sphi 0, %s61
      %s83 = sphi 0, %s85
      %s86 = sphi 0, %s83
      %s87 = sphi 0, %s86
      %s103 = sphi 0, %s87
      %s107 = sphi 0, %s107
      %s109 = sphi 0, %s107
      %s110 = sphi 0, %s109
      %s124 = sphi 0, %s110
      %s128 = sphi 0, %s128
      %s130 = sphi 0, %s128
      %s131 = sphi 0, %s130
      %s145 = sphi 0, %s131
      %s149 = sphi 0, %s149
      %s151 = sphi 0, %s149
      %s152 = sphi 0, %s151
      %s166 = sphi 0, %s152
      %s170 = sphi 0, %s170
      %s172 = sphi 0, %s170
      %s173 = sphi 0, %s172
      %s187 = sphi 0, %s173
      %s191 = sphi 0, %s191
      %s193 = sphi 0, %s191
      %s194 = sphi 0, %s193
      %s208 = sphi 0, %s194
      %s212 = sphi 0, %s212
      %s214 = sphi 0, %s212
      %s215 = sphi 0, %s214
      %s229 = sphi 0, %s215
      %s233 = sphi 0, %s233
      %s235 = sphi 0, %s233
      %s236 = sphi 0, %s235
      %s250 = sphi 0, %s236
      %s254 = sphi 0, %s254
      %s256 = sphi 0, %s254
      %s257 = sphi 0, %s256
      %s271 = sphi 0, %s257
      %s275 = sphi 0, %s275
      %s277 = sphi 0, %s275
      %s278 = sphi 0, %s277
      %s292 = sphi 0, %s278
    $region4: #{tpu_custom_call.1} parent=1 // loop_header_branch
      %29 = sbr.rel (%p27) target = $region8
    $region5: #{tpu_custom_call.1} parent=1 // loop_body
      %s31 = ssub.s32 %s26, 1
      %s32 = ssub.s32 %s26, 2
      %s33 = sadd.s32 %s26, 1
      %s35 = sadd.s32 %s34, 1
      %p38 = scmp.eq.s32.totalorder %s26, 1
      %p39 = scmp.ne.s32.totalorder %s34, %s36
      %p40 = scmp.eq.s32.totalorder %s26, 0
      %p41 = por %p39, %p40
      %p42 = scmp.ne.s32.totalorder %s34, %s36
      %p43 = scmp.eq.s32.totalorder %s31, 1
      %p44 = por %p42, %p43
      %p45 = scmp.ne.s32.totalorder %s36, %s37
      %p46 = scmp.eq.s32.totalorder %s31, 0
      %p47 = por %p45, %p46
      %p48 = scmp.ne.s32.totalorder %s36, %s37
      %p49 = scmp.eq.s32.totalorder %s32, 1
      %p50 = por %p48, %p49
      %p52 = scmp.ne.s32.totalorder %s37, %s51
      %p53 = scmp.eq.s32.totalorder %s32, 0
      %p54 = por %p52, %p53
      %s55 = ssub.s32 %s26, %s33
      %p56 = scmp.eq.s32.totalorder %s55, 0
      %s58 = sadd.s32 %s57, 1
      %s59 = scalar_select %p56, %s57, %s58
      %p62 = pneg %p56
      %p63 = scmp.eq.s32.totalorder %s26, 1
      %p64 = por %p62, %p63
      %p65 = scmp.ne.s32.totalorder %s57, %s60
      %p66 = scmp.eq.s32.totalorder %s26, 0
      %p67 = por %p65, %p66
      %p68 = scmp.ne.s32.totalorder %s57, %s60
      %p69 = scmp.eq.s32.totalorder %s31, 1
      %p70 = por %p68, %p69
      %p71 = scmp.ne.s32.totalorder %s60, %s61
      %p72 = scmp.eq.s32.totalorder %s31, 0
      %p73 = por %p71, %p72
      %p74 = scmp.ne.s32.totalorder %s60, %s61
      %p75 = scmp.eq.s32.totalorder %s32, 1
      %p76 = por %p74, %p75
      %p78 = scmp.ne.s32.totalorder %s61, %s77
      %p79 = scmp.eq.s32.totalorder %s32, 0
      %p80 = por %p78, %p79
      %s81 = ssub.s32 %s26, %s33
      %p82 = scmp.eq.s32.totalorder %s81, 0
      %s84 = sadd.s32 %s83, 1
      %s85 = scalar_select %p82, %s83, %s84
      %p88 = pneg %p82
      %p89 = scmp.eq.s32.totalorder %s26, 1
      %p90 = por %p88, %p89
      %p91 = scmp.ne.s32.totalorder %s83, %s86
      %p92 = scmp.eq.s32.totalorder %s26, 0
      %p93 = por %p91, %p92
      %p94 = scmp.ne.s32.totalorder %s83, %s86
      %p95 = scmp.eq.s32.totalorder %s31, 1
      %p96 = por %p94, %p95
      %p97 = scmp.ne.s32.totalorder %s86, %s87
      %p98 = scmp.eq.s32.totalorder %s31, 0
      %p99 = por %p97, %p98
      %p100 = scmp.ne.s32.totalorder %s86, %s87
      %p101 = scmp.eq.s32.totalorder %s32, 1
      %p102 = por %p100, %p101
      %p104 = scmp.ne.s32.totalorder %s87, %s103
      %p105 = scmp.eq.s32.totalorder %s32, 0
      %p106 = por %p104, %p105
      %s108 = sadd.s32 %s107, 1
      %p111 = scmp.eq.s32.totalorder %s26, 1
      %p112 = scmp.ne.s32.totalorder %s107, %s109
      %p113 = scmp.eq.s32.totalorder %s26, 0
      %p114 = por %p112, %p113
      %p115 = scmp.ne.s32.totalorder %s107, %s109
      %p116 = scmp.eq.s32.totalorder %s31, 1
      %p117 = por %p115, %p116
      %p118 = scmp.ne.s32.totalorder %s109, %s110
      %p119 = scmp.eq.s32.totalorder %s31, 0
      %p120 = por %p118, %p119
      %p121 = scmp.ne.s32.totalorder %s109, %s110
      %p122 = scmp.eq.s32.totalorder %s32, 1
      %p123 = por %p121, %p122
      %p125 = scmp.ne.s32.totalorder %s110, %s124
      %p126 = scmp.eq.s32.totalorder %s32, 0
      %p127 = por %p125, %p126
      %s129 = sadd.s32 %s128, 1
      %p132 = scmp.eq.s32.totalorder %s26, 1
      %p133 = scmp.ne.s32.totalorder %s128, %s130
      %p134 = scmp.eq.s32.totalorder %s26, 0
      %p135 = por %p133, %p134
      %p136 = scmp.ne.s32.totalorder %s128, %s130
      %p137 = scmp.eq.s32.totalorder %s31, 1
      %p138 = por %p136, %p137
      %p139 = scmp.ne.s32.totalorder %s130, %s131
      %p140 = scmp.eq.s32.totalorder %s31, 0
      %p141 = por %p139, %p140
      %p142 = scmp.ne.s32.totalorder %s130, %s131
      %p143 = scmp.eq.s32.totalorder %s32, 1
      %p144 = por %p142, %p143
      %p146 = scmp.ne.s32.totalorder %s131, %s145
      %p147 = scmp.eq.s32.totalorder %s32, 0
      %p148 = por %p146, %p147
      %s150 = sadd.s32 %s149, 1
      %p153 = scmp.eq.s32.totalorder %s26, 1
      %p154 = scmp.ne.s32.totalorder %s149, %s151
      %p155 = scmp.eq.s32.totalorder %s26, 0
      %p156 = por %p154, %p155
      %p157 = scmp.ne.s32.totalorder %s149, %s151
      %p158 = scmp.eq.s32.totalorder %s31, 1
      %p159 = por %p157, %p158
      %p160 = scmp.ne.s32.totalorder %s151, %s152
      %p161 = scmp.eq.s32.totalorder %s31, 0
      %p162 = por %p160, %p161
      %p163 = scmp.ne.s32.totalorder %s151, %s152
      %p164 = scmp.eq.s32.totalorder %s32, 1
      %p165 = por %p163, %p164
      %p167 = scmp.ne.s32.totalorder %s152, %s166
      %p168 = scmp.eq.s32.totalorder %s32, 0
      %p169 = por %p167, %p168
      %s171 = sadd.s32 %s170, 1
      %p174 = scmp.eq.s32.totalorder %s26, 1
      %p175 = scmp.ne.s32.totalorder %s170, %s172
      %p176 = scmp.eq.s32.totalorder %s26, 0
      %p177 = por %p175, %p176
      %p178 = scmp.ne.s32.totalorder %s170, %s172
      %p179 = scmp.eq.s32.totalorder %s31, 1
      %p180 = por %p178, %p179
      %p181 = scmp.ne.s32.totalorder %s172, %s173
      %p182 = scmp.eq.s32.totalorder %s31, 0
      %p183 = por %p181, %p182
      %p184 = scmp.ne.s32.totalorder %s172, %s173
      %p185 = scmp.eq.s32.totalorder %s32, 1
      %p186 = por %p184, %p185
      %p188 = scmp.ne.s32.totalorder %s173, %s187
      %p189 = scmp.eq.s32.totalorder %s32, 0
      %p190 = por %p188, %p189
      %s192 = sadd.s32 %s191, 1
      %p195 = scmp.eq.s32.totalorder %s26, 1
      %p196 = scmp.ne.s32.totalorder %s191, %s193
      %p197 = scmp.eq.s32.totalorder %s26, 0
      %p198 = por %p196, %p197
      %p199 = scmp.ne.s32.totalorder %s191, %s193
      %p200 = scmp.eq.s32.totalorder %s31, 1
      %p201 = por %p199, %p200
      %p202 = scmp.ne.s32.totalorder %s193, %s194
      %p203 = scmp.eq.s32.totalorder %s31, 0
      %p204 = por %p202, %p203
      %p205 = scmp.ne.s32.totalorder %s193, %s194
      %p206 = scmp.eq.s32.totalorder %s32, 1
      %p207 = por %p205, %p206
      %p209 = scmp.ne.s32.totalorder %s194, %s208
      %p210 = scmp.eq.s32.totalorder %s32, 0
      %p211 = por %p209, %p210
      %s213 = sadd.s32 %s212, 1
      %p216 = scmp.eq.s32.totalorder %s26, 1
      %p217 = scmp.ne.s32.totalorder %s212, %s214
      %p218 = scmp.eq.s32.totalorder %s26, 0
      %p219 = por %p217, %p218
      %p220 = scmp.ne.s32.totalorder %s212, %s214
      %p221 = scmp.eq.s32.totalorder %s31, 1
      %p222 = por %p220, %p221
      %p223 = scmp.ne.s32.totalorder %s214, %s215
      %p224 = scmp.eq.s32.totalorder %s31, 0
      %p225 = por %p223, %p224
      %p226 = scmp.ne.s32.totalorder %s214, %s215
      %p227 = scmp.eq.s32.totalorder %s32, 1
      %p228 = por %p226, %p227
      %p230 = scmp.ne.s32.totalorder %s215, %s229
      %p231 = scmp.eq.s32.totalorder %s32, 0
      %p232 = por %p230, %p231
      %s234 = sadd.s32 %s233, 1
      %p237 = scmp.eq.s32.totalorder %s26, 1
      %p238 = scmp.ne.s32.totalorder %s233, %s235
      %p239 = scmp.eq.s32.totalorder %s26, 0
      %p240 = por %p238, %p239
      %p241 = scmp.ne.s32.totalorder %s233, %s235
      %p242 = scmp.eq.s32.totalorder %s31, 1
      %p243 = por %p241, %p242
      %p244 = scmp.ne.s32.totalorder %s235, %s236
      %p245 = scmp.eq.s32.totalorder %s31, 0
      %p246 = por %p244, %p245
      %p247 = scmp.ne.s32.totalorder %s235, %s236
      %p248 = scmp.eq.s32.totalorder %s32, 1
      %p249 = por %p247, %p248
      %p251 = scmp.ne.s32.totalorder %s236, %s250
      %p252 = scmp.eq.s32.totalorder %s32, 0
      %p253 = por %p251, %p252
      %s255 = sadd.s32 %s254, 1
      %p258 = scmp.eq.s32.totalorder %s26, 1
      %p259 = scmp.ne.s32.totalorder %s254, %s256
      %p260 = scmp.eq.s32.totalorder %s26, 0
      %p261 = por %p259, %p260
      %p262 = scmp.ne.s32.totalorder %s254, %s256
      %p263 = scmp.eq.s32.totalorder %s31, 1
      %p264 = por %p262, %p263
      %p265 = scmp.ne.s32.totalorder %s256, %s257
      %p266 = scmp.eq.s32.totalorder %s31, 0
      %p267 = por %p265, %p266
      %p268 = scmp.ne.s32.totalorder %s256, %s257
      %p269 = scmp.eq.s32.totalorder %s32, 1
      %p270 = por %p268, %p269
      %p272 = scmp.ne.s32.totalorder %s257, %s271
      %p273 = scmp.eq.s32.totalorder %s32, 0
      %p274 = por %p272, %p273
      %s276 = sadd.s32 %s275, 1
      %p279 = scmp.eq.s32.totalorder %s26, 1
      %p280 = scmp.ne.s32.totalorder %s275, %s277
      %p281 = scmp.eq.s32.totalorder %s26, 0
      %p282 = por %p280, %p281
      %p283 = scmp.ne.s32.totalorder %s275, %s277
      %p284 = scmp.eq.s32.totalorder %s31, 1
      %p285 = por %p283, %p284
      %p286 = scmp.ne.s32.totalorder %s277, %s278
      %p287 = scmp.eq.s32.totalorder %s31, 0
      %p288 = por %p286, %p287
      %p289 = scmp.ne.s32.totalorder %s277, %s278
      %p290 = scmp.eq.s32.totalorder %s32, 1
      %p291 = por %p289, %p290
      %p293 = scmp.ne.s32.totalorder %s278, %s292
      %p294 = scmp.eq.s32.totalorder %s32, 0
      %p295 = por %p293, %p294
      %p296 = scmp.le.s32.totalorder 1, %s26
      %p297 = scmp.lt.s32.totalorder %s26, 3
      %p298 = pnand %p296, %p297
      %p299 = pneg %p298
      // Predicated region
      $region9: #{tpu_custom_call.1} parent=5 // pred_check
        _
      $region10: #{tpu_custom_call.1} parent=5 // pred_check_branch
        %301 = sbr.rel (%p298) target = $region12
      $region11: #{tpu_custom_call.1} parent=5 // pred_region
        %s302 = ssub.s32 %s26, 1
        // Predicated region
        $region13: #{tpu_custom_call.1} parent=11 // pred_check
          %p303 = pneg %p47
        $region14: #{tpu_custom_call.1} parent=11 // pred_check_branch
          %305 = sbr.rel (%p303) target = $region16
        $region15: #{tpu_custom_call.1} parent=11 // pred_region
          _
        $region16: #{tpu_custom_call.1} parent=11 // pred_fallthru
          _
        // Predicated region
        $region17: #{tpu_custom_call.1} parent=11 // pred_check
          %p306 = pneg %p120
        $region18: #{tpu_custom_call.1} parent=11 // pred_check_branch
          %308 = sbr.rel (%p306) target = $region20
        $region19: #{tpu_custom_call.1} parent=11 // pred_region
          _
        $region20: #{tpu_custom_call.1} parent=11 // pred_fallthru
          _
        // Predicated region
        $region21: #{tpu_custom_call.1} parent=11 // pred_check
          %p309 = pneg %p141
        $region22: #{tpu_custom_call.1} parent=11 // pred_check_branch
          %311 = sbr.rel (%p309) target = $region24
        $region23: #{tpu_custom_call.1} parent=11 // pred_region
          %s313 = ssub.s32 512, 512
          %314 = vsyncadd [#allocation9], %s313
          %s315 = sshll.u32 [#allocation10], 4
          %s316 = int_to_ptr.vmem [resolvable:$true] %s315
          %321 = dma.hbm_to_vmem [thread:$0]  %s4, 512, %s316, [#allocation9], 128, 128, 8
        $region24: #{tpu_custom_call.1} parent=11 // pred_fallthru
          _
        // Predicated region
        $region25: #{tpu_custom_call.1} parent=11 // pred_check
          %p322 = pneg %p162
        $region26: #{tpu_custom_call.1} parent=11 // pred_check_branch
          %324 = sbr.rel (%p322) target = $region28
        $region27: #{tpu_custom_call.1} parent=11 // pred_region
          _
        $region28: #{tpu_custom_call.1} parent=11 // pred_fallthru
          _
        // Predicated region
        $region29: #{tpu_custom_call.1} parent=11 // pred_check
          %p325 = pneg %p183
        $region30: #{tpu_custom_call.1} parent=11 // pred_check_branch
          %327 = sbr.rel (%p325) target = $region32
        $region31: #{tpu_custom_call.1} parent=11 // pred_region
          _
        $region32: #{tpu_custom_call.1} parent=11 // pred_fallthru
          _
        // Predicated region
        $region33: #{tpu_custom_call.1} parent=11 // pred_check
          %p328 = pneg %p204
        $region34: #{tpu_custom_call.1} parent=11 // pred_check_branch
          %330 = sbr.rel (%p328) target = $region36
        $region35: #{tpu_custom_call.1} parent=11 // pred_region
          _
        $region36: #{tpu_custom_call.1} parent=11 // pred_fallthru
          _
        // Predicated region
        $region37: #{tpu_custom_call.1} parent=11 // pred_check
          %p331 = pneg %p225
        $region38: #{tpu_custom_call.1} parent=11 // pred_check_branch
          %333 = sbr.rel (%p331) target = $region40
        $region39: #{tpu_custom_call.1} parent=11 // pred_region
          _
        $region40: #{tpu_custom_call.1} parent=11 // pred_fallthru
          _
        // Predicated region
        $region41: #{tpu_custom_call.1} parent=11 // pred_check
          %p334 = pneg %p246
        $region42: #{tpu_custom_call.1} parent=11 // pred_check_branch
          %336 = sbr.rel (%p334) target = $region44
        $region43: #{tpu_custom_call.1} parent=11 // pred_region
          _
        $region44: #{tpu_custom_call.1} parent=11 // pred_fallthru
          _
      $region12: #{tpu_custom_call.1} parent=5 // pred_fallthru
        _
      %p337 = scmp.lt.s32.totalorder %s26, 2
      // Predicated region
      $region45: #{tpu_custom_call.1} parent=5 // pred_check
        %p338 = pneg %p337
      $region46: #{tpu_custom_call.1} parent=5 // pred_check_branch
        %340 = sbr.rel (%p338) target = $region48
      $region47: #{tpu_custom_call.1} parent=5 // pred_region
        // Predicated region
        $region49: #{tpu_custom_call.1} parent=47 // pred_check
          %p341 = pneg %p67
        $region50: #{tpu_custom_call.1} parent=47 // pred_check_branch
          %343 = sbr.rel (%p341) target = $region52
        $region51: #{tpu_custom_call.1} parent=47 // pred_region
          %s344 = sand.u32 %s57, 1
          %s345 = scalar_lea.sflag [#allocation6], %s344
          %s346 = sand.u32 %s57, 1
          %s347 = smul.addr %s346, 8
          %s348 = scalar_lea.vmem [#allocation5], %s347
          %s350 = ssub.s32 128, 128
          %351 = vsyncadd %s345, %s350
          %s352 = smul.addr %s26, 128
          %s353 = scalar_lea.hbm %s1, %s352
          %s355 = sshll.u32 %s348, 4
          %s356 = int_to_ptr.vmem [resolvable:$true] %s355
          %358 = dma.hbm_to_vmem [thread:$0]  %s353, 128, %s356, %s345
        $region52: #{tpu_custom_call.1} parent=47 // pred_fallthru
          _
        // Predicated region
        $region53: #{tpu_custom_call.1} parent=47 // pred_check
          %p359 = pneg %p93
        $region54: #{tpu_custom_call.1} parent=47 // pred_check_branch
          %361 = sbr.rel (%p359) target = $region56
        $region55: #{tpu_custom_call.1} parent=47 // pred_region
          %s362 = sand.u32 %s26, 1
          %s363 = scalar_lea.sflag [#allocation9], %s362
          %s364 = sand.u32 %s83, 1
          %s365 = smul.addr %s364, 8
          %s366 = scalar_lea.vmem [#allocation8], %s365
          %s368 = ssub.s32 128, 128
          %369 = vsyncadd %s363, %s368
          %s370 = smul.addr %s26, 128
          %s371 = scalar_lea.hbm %s2, %s370
          %s373 = sshll.u32 %s366, 4
          %s374 = int_to_ptr.vmem [resolvable:$true] %s373
          %376 = dma.hbm_to_vmem [thread:$0]  %s371, 128, %s374, %s363
        $region56: #{tpu_custom_call.1} parent=47 // pred_fallthru
          _
      $region48: #{tpu_custom_call.1} parent=5 // pred_fallthru
        _
      %p377 = scmp.le.s32.totalorder 1, %s26
      %p378 = scmp.lt.s32.totalorder %s26, 3
      %p379 = pnand %p377, %p378
      %p380 = pneg %p379
      // Predicated region
      $region57: #{tpu_custom_call.1} parent=5 // pred_check
        _
      $region58: #{tpu_custom_call.1} parent=5 // pred_check_branch
        %382 = sbr.rel (%p379) target = $region60
      $region59: #{tpu_custom_call.1} parent=5 // pred_region
        %s383 = ssub.s32 %s26, 1
        %s384 = sand.u32 %s60, 1
        %s385 = scalar_lea.sflag [#allocation6], %s384
        %s386 = sand.u32 %s60, 1
        %s387 = smul.addr %s386, 8
        %s388 = scalar_lea.vmem [#allocation5], %s387
        // Predicated region
        $region61: #{tpu_custom_call.1} parent=59 // pred_check
          %p389 = pneg %p73
        $region62: #{tpu_custom_call.1} parent=59 // pred_check_branch
          %391 = sbr.rel (%p389) target = $region64
        $region63: #{tpu_custom_call.1} parent=59 // pred_region
          %392 = dma.done %s385, 128
        $region64: #{tpu_custom_call.1} parent=59 // pred_fallthru
          _
        %s393 = sand.u32 %s31, 1
        %s394 = scalar_lea.sflag [#allocation9], %s393
        %s395 = sand.u32 %s86, 1
        %s396 = smul.addr %s395, 8
        %s397 = scalar_lea.vmem [#allocation8], %s396
        // Predicated region
        $region65: #{tpu_custom_call.1} parent=59 // pred_check
          %p398 = pneg %p99
        $region66: #{tpu_custom_call.1} parent=59 // pred_check_branch
          %400 = sbr.rel (%p398) target = $region68
        $region67: #{tpu_custom_call.1} parent=59 // pred_region
          %401 = dma.done %s394, 128
        $region68: #{tpu_custom_call.1} parent=59 // pred_fallthru
          _
        // Predicated region
        $region69: #{tpu_custom_call.1} parent=59 // pred_check
          %p402 = pneg %p141
        $region70: #{tpu_custom_call.1} parent=59 // pred_check_branch
          %404 = sbr.rel (%p402) target = $region72
        $region71: #{tpu_custom_call.1} parent=59 // pred_region
          %405 = dma.done [#allocation9], 512
        $region72: #{tpu_custom_call.1} parent=59 // pred_fallthru
          _
        %p406 = pneg %p47
        %p407 = pneg %p44
        %s408 = sand.u32 %s60, 1
        %s409 = scalar_lea.sflag [#allocation6], %s408
        %s410 = sand.u32 %s60, 1
        %s411 = smul.addr %s410, 8
        %s412 = scalar_lea.vmem [#allocation5], %s411
        %p413 = pneg %p73
        %p414 = pneg %p70
        %s415 = sand.u32 %s31, 1
        %s416 = scalar_lea.sflag [#allocation9], %s415
        %s417 = sand.u32 %s86, 1
        %s418 = smul.addr %s417, 8
        %s419 = scalar_lea.vmem [#allocation8], %s418
        %p420 = pneg %p99
        %p421 = pneg %p96
        %p422 = pneg %p120
        %p423 = pneg %p117
        %p424 = pneg %p141
        %p425 = pneg %p138
        %p426 = pneg %p162
        %p427 = pneg %p159
        %p428 = pneg %p183
        %p429 = pneg %p180
        %p430 = pneg %p204
        %p431 = pneg %p201
        %p432 = pneg %p225
        %p433 = pneg %p222
        %p434 = pneg %p246
        %p435 = pneg %p243
        %p436 = pneg %p267
        %p437 = pneg %p264
        %p438 = pneg %p288
        %p439 = pneg %p285
        %p440 = scmp.eq.s32.totalorder %s31, 0
        // Predicated region
        $region73: #{tpu_custom_call.1} parent=59 // pred_check
          %p441 = pneg %p440
        $region74: #{tpu_custom_call.1} parent=59 // pred_check_branch
          %443 = sbr.rel (%p441) target = $region76
        $region75: #{tpu_custom_call.1} parent=59 // pred_region
          %vm444 = vcmask 517120
          %445 = vst.msk [vmem:[#allocation3] sm:$0x3] %vm444, 0.0
          %446 = vst.msk [vmem:[#allocation4] sm:$0x3] %vm444, 0.0
        $region76: #{tpu_custom_call.1} parent=59 // pred_fallthru
          _
        %v447 = vld [vmem:[%s388] sm:$0xff]
        %v448 = vld [vmem:[%s3] sm:$0xff]
        %v449 = vld [vmem:[%s3 + $0x8] sm:$0xff]
        %v450 = vld [vmem:[%s3 + $0x10] sm:$0xff]
        %v451 = vld [vmem:[%s3 + $0x18] sm:$0xff]
        %v452 = vld [vmem:[%s5] sm:$0x1]
        %v454 = vlaneseq
        %v455 = vshrl.u32 %v454, 7
        %v456 = vsub.s32 0, %v455
        %v457 = vrot.slane %v452, %v456
        %vm459 = vcmask 261120
        %v461 = vsel %vm459, %v447, 0
        %463 = vmatprep.subr.mxu0 0.0
        %464 = vmatpush1.msra.mxu0 %v448
        %465 = vmatprep.subr.mxu0 0.0
        %466 = vmatpush1.msra.mxu0 %v449
        %467 = vmatprep.subr.mxu0 0.0
        %468 = vmatpush1.msra.mxu0 %v450
        %469 = vmatprep.subr.mxu0 0.0
        %470 = vmatpush1.msra.mxu0 %v451
        %471 = vmatprep.subr.mxu0 0.0
        %472 = vmatpush1.msra.mxu0 0.0
        %473 = vmatprep.subr.mxu0 0.0
        %474 = vmatpush1.msra.mxu0 0.0
        %475 = vmatprep.subr.mxu0 0.0
        %476 = vmatpush1.msra.mxu0 0.0
        %477 = vmatprep.subr.mxu0 0.0
        %478 = vmatpush1.msra.mxu0 0.0
        %479 = vmatprep.subr.mxu0 0.0
        %480 = vmatpush1.msra.mxu0 0.0
        %481 = vmatprep.subr.mxu0 0.0
        %482 = vmatpush1.msra.mxu0 0.0
        %483 = vmatprep.subr.mxu0 0.0
        %484 = vmatpush1.msra.mxu0 0.0
        %485 = vmatprep.subr.mxu0 0.0
        %486 = vmatpush1.msra.mxu0 0.0
        %487 = vmatprep.subr.mxu0 0.0
        %488 = vmatpush1.msra.mxu0 0.0
        %489 = vmatprep.subr.mxu0 0.0
        %490 = vmatpush1.msra.mxu0 0.0
        %491 = vmatprep.subr.mxu0 0.0
        %492 = vmatpush1.msra.mxu0 0.0
        %493 = vmatprep.subr.mxu0 0.0
        %494 = vmatpush1.msra.mxu0 0.0
        %495 = vmatprep.subr.mxu0 0.0
        %496 = vmatpush1.msra.mxu0 0.0
        %497 = vmatprep.subr.mxu0 0.0
        %498 = vmatpush1.msra.mxu0 0.0
        %499 = vmatprep.subr.mxu0 0.0
        %500 = vmatpush1.msra.mxu0 0.0
        %501 = vmatprep.subr.mxu0 0.0
        %502 = vmatpush1.msra.mxu0 0.0
        %503 = vmatprep.subr.mxu0 0.0
        %504 = vmatpush1.msra.mxu0 0.0
        %505 = vmatprep.subr.mxu0 0.0
        %506 = vmatpush1.msra.mxu0 0.0
        %507 = vmatprep.subr.mxu0 0.0
        %508 = vmatpush1.msra.mxu0 0.0
        %509 = vmatprep.subr.mxu0 0.0
        %510 = vmatpush1.msra.mxu0 0.0
        %511 = vmatprep.subr.mxu0 0.0
        %512 = vmatpush1.msra.mxu0 0.0
        %513 = vmatprep.subr.mxu0 0.0
        %514 = vmatpush1.msra.mxu0 0.0
        %515 = vmatprep.subr.mxu0 0.0
        %516 = vmatpush1.msra.mxu0 0.0
        %517 = vmatprep.subr.mxu0 0.0
        %518 = vmatpush1.msra.mxu0 0.0
        %519 = vmatprep.subr.mxu0 0.0
        %520 = vmatpush1.msra.mxu0 0.0
        %521 = vmatprep.subr.mxu0 0.0
        %522 = vmatpush1.msra.mxu0 0.0
        %523 = vmatprep.subr.mxu0 0.0
        %524 = vmatpush1.msra.mxu0 0.0
        %525 = vmatprep.subr.mxu0 0.0
        %526 = vmatpush1.msra.mxu0 0.0
        %527 = vmatprep.mubr.f32.mxu0 0.0
        %528 = vmatmul.mubr.f32.gmra.mrb[0].mxu0 %v461
        %v529 = vpop.f32.mrb[0].mxu0
        %v530 = vadd.f32 %v457, %v529
        %v531 = vpop.f32.mrb[0].mxu0
        %532 = vdwg.mxu0
        %533 = vst.msk [vmem:[#allocation2] sm:$0xff] %vm459, %v530
        %v534 = vld [vmem:[%s397] sm:$0xff]
        %v535 = vld [vmem:[#allocation10] sm:$0xff]
        %v536 = vld [vmem:[#allocation10 + $0x8] sm:$0xff]
        %v537 = vld [vmem:[#allocation10 + $0x10] sm:$0xff]
        %v538 = vld [vmem:[#allocation10 + $0x18] sm:$0xff]
        %v539 = vld [vmem:[%s6] sm:$0x1]
        %v541 = vlaneseq
        %v542 = vshrl.u32 %v541, 7
        %v543 = vsub.s32 0, %v542
        %v544 = vrot.slane %v539, %v543
        %v547 = vsel %vm459, %v534, 0
        %549 = vmatprep.subr.mxu0 0.0
        %550 = vmatpush1.msra.mxu0 %v535
        %551 = vmatprep.subr.mxu0 0.0
        %552 = vmatpush1.msra.mxu0 %v536
        %553 = vmatprep.subr.mxu0 0.0
        %554 = vmatpush1.msra.mxu0 %v537
        %555 = vmatprep.subr.mxu0 0.0
        %556 = vmatpush1.msra.mxu0 %v538
        %557 = vmatprep.subr.mxu0 0.0
        %558 = vmatpush1.msra.mxu0 0.0
        %559 = vmatprep.subr.mxu0 0.0
        %560 = vmatpush1.msra.mxu0 0.0
        %561 = vmatprep.subr.mxu0 0.0
        %562 = vmatpush1.msra.mxu0 0.0
        %563 = vmatprep.subr.mxu0 0.0
        %564 = vmatpush1.msra.mxu0 0.0
        %565 = vmatprep.subr.mxu0 0.0
        %566 = vmatpush1.msra.mxu0 0.0
        %567 = vmatprep.subr.mxu0 0.0
        %568 = vmatpush1.msra.mxu0 0.0
        %569 = vmatprep.subr.mxu0 0.0
        %570 = vmatpush1.msra.mxu0 0.0
        %571 = vmatprep.subr.mxu0 0.0
        %572 = vmatpush1.msra.mxu0 0.0
        %573 = vmatprep.subr.mxu0 0.0
        %574 = vmatpush1.msra.mxu0 0.0
        %575 = vmatprep.subr.mxu0 0.0
        %576 = vmatpush1.msra.mxu0 0.0
        %577 = vmatprep.subr.mxu0 0.0
        %578 = vmatpush1.msra.mxu0 0.0
        %579 = vmatprep.subr.mxu0 0.0
        %580 = vmatpush1.msra.mxu0 0.0
        %581 = vmatprep.subr.mxu0 0.0
        %582 = vmatpush1.msra.mxu0 0.0
        %583 = vmatprep.subr.mxu0 0.0
        %584 = vmatpush1.msra.mxu0 0.0
        %585 = vmatprep.subr.mxu0 0.0
        %586 = vmatpush1.msra.mxu0 0.0
        %587 = vmatprep.subr.mxu0 0.0
        %588 = vmatpush1.msra.mxu0 0.0
        %589 = vmatprep.subr.mxu0 0.0
        %590 = vmatpush1.msra.mxu0 0.0
        %591 = vmatprep.subr.mxu0 0.0
        %592 = vmatpush1.msra.mxu0 0.0
        %593 = vmatprep.subr.mxu0 0.0
        %594 = vmatpush1.msra.mxu0 0.0
        %595 = vmatprep.subr.mxu0 0.0
        %596 = vmatpush1.msra.mxu0 0.0
        %597 = vmatprep.subr.mxu0 0.0
        %598 = vmatpush1.msra.mxu0 0.0
        %599 = vmatprep.subr.mxu0 0.0
        %600 = vmatpush1.msra.mxu0 0.0
        %601 = vmatprep.subr.mxu0 0.0
        %602 = vmatpush1.msra.mxu0 0.0
        %603 = vmatprep.subr.mxu0 0.0
        %604 = vmatpush1.msra.mxu0 0.0
        %605 = vmatprep.subr.mxu0 0.0
        %606 = vmatpush1.msra.mxu0 0.0
        %607 = vmatprep.subr.mxu0 0.0
        %608 = vmatpush1.msra.mxu0 0.0
        %609 = vmatprep.subr.mxu0 0.0
        %610 = vmatpush1.msra.mxu0 0.0
        %611 = vmatprep.subr.mxu0 0.0
        %612 = vmatpush1.msra.mxu0 0.0
        %613 = vmatprep.mubr.f32.mxu0 0.0
        %614 = vmatmul.mubr.f32.gmra.mrb[0].mxu0 %v547
        %v615 = vpop.f32.mrb[0].mxu0
        %v616 = vadd.f32 %v544, %v615
        %v617 = vpop.f32.mrb[0].mxu0
        %618 = vdwg.mxu0
        %620 = vrot.lane.b32.xlu0 %v616, 32
        %v621 = vpop.permute.xlu0 %620
        %vm623 = vcmask 523520
        %624 = vst.msk [vmem:[#allocation2] sm:$0xff] %vm623, %v621
        %v625 = vld [vmem:[%s0] sm:$0x3]
        %v626 = vsub.s32 %v625, 1
        %v627 = vlaneseq
        %v628 = vand.u32 %v627, 127
        %vm629 = vcmp.ge.s32.totalorder %v628, 32
        %v630 = vsub.s32 7, %v626
        %631 = vset.pattern.permute.xlu0 0
        %632 = vperm.xlu0 %631, %v630
        %v633 = vpop.permute.xlu0 %632
        %634 = vset.pattern.permute.xlu0 0
        %635 = vperm.xlu0 %634, %v626
        %v636 = vpop.permute.xlu0 %635
        %v637 = vsel %vm629, %v633, %v636
        %v638 = vld [vmem:[%s7] sm:$0xff]
        %v639 = vld [vmem:[%s7 + $0x8] sm:$0xff]
        %v640 = vld [vmem:[%s7 + $0x10] sm:$0xff]
        %v641 = vld [vmem:[%s7 + $0x18] sm:$0xff]
        %v642 = vld [vmem:[%s7 + $0x20] sm:$0xff]
        %v643 = vld [vmem:[%s7 + $0x28] sm:$0xff]
        %v644 = vld [vmem:[%s7 + $0x30] sm:$0xff]
        %v645 = vld [vmem:[%s7 + $0x38] sm:$0xff]
        %v646 = vld [vmem:[#allocation3] sm:$0x3]
        %v647 = vld [vmem:[#allocation4] sm:$0x3]
        %s648 = smul.u32 %s31, 4
        %v649 = vld [vmem:[#allocation2] sm:$0x3]
        %vm650 = vcmask 523264
        %v652 = vsel %vm650, %v646, 0
        %654 = vmatprep.subr.mxu0 0.0
        %655 = vmatpush1.msra.mxu0 %v638
        %656 = vmatprep.subr.mxu0 0.0
        %657 = vmatpush1.msra.mxu0 %v639
        %658 = vmatprep.subr.mxu0 0.0
        %659 = vmatpush1.msra.mxu0 %v640
        %660 = vmatprep.subr.mxu0 0.0
        %661 = vmatpush1.msra.mxu0 %v641
        %662 = vmatprep.subr.mxu0 0.0
        %663 = vmatpush1.msra.mxu0 %v642
        %664 = vmatprep.subr.mxu0 0.0
        %665 = vmatpush1.msra.mxu0 %v643
        %666 = vmatprep.subr.mxu0 0.0
        %667 = vmatpush1.msra.mxu0 %v644
        %668 = vmatprep.subr.mxu0 0.0
        %669 = vmatpush1.msra.mxu0 %v645
        %670 = vmatprep.subr.mxu0 0.0
        %671 = vmatpush1.msra.mxu0 0.0
        %672 = vmatprep.subr.mxu0 0.0
        %673 = vmatpush1.msra.mxu0 0.0
        %674 = vmatprep.subr.mxu0 0.0
        %675 = vmatpush1.msra.mxu0 0.0
        %676 = vmatprep.subr.mxu0 0.0
        %677 = vmatpush1.msra.mxu0 0.0
        %678 = vmatprep.subr.mxu0 0.0
        %679 = vmatpush1.msra.mxu0 0.0
        %680 = vmatprep.subr.mxu0 0.0
        %681 = vmatpush1.msra.mxu0 0.0
        %682 = vmatprep.subr.mxu0 0.0
        %683 = vmatpush1.msra.mxu0 0.0
        %684 = vmatprep.subr.mxu0 0.0
        %685 = vmatpush1.msra.mxu0 0.0
        %686 = vmatprep.subr.mxu0 0.0
        %687 = vmatpush1.msra.mxu0 0.0
        %688 = vmatprep.subr.mxu0 0.0
        %689 = vmatpush1.msra.mxu0 0.0
        %690 = vmatprep.subr.mxu0 0.0
        %691 = vmatpush1.msra.mxu0 0.0
        %692 = vmatprep.subr.mxu0 0.0
        %693 = vmatpush1.msra.mxu0 0.0
        %694 = vmatprep.subr.mxu0 0.0
        %695 = vmatpush1.msra.mxu0 0.0
        %696 = vmatprep.subr.mxu0 0.0
        %697 = vmatpush1.msra.mxu0 0.0
        %698 = vmatprep.subr.mxu0 0.0
        %699 = vmatpush1.msra.mxu0 0.0
        %700 = vmatprep.subr.mxu0 0.0
        %701 = vmatpush1.msra.mxu0 0.0
        %702 = vmatprep.subr.mxu0 0.0
        %703 = vmatpush1.msra.mxu0 0.0
        %704 = vmatprep.subr.mxu0 0.0
        %705 = vmatpush1.msra.mxu0 0.0
        %706 = vmatprep.subr.mxu0 0.0
        %707 = vmatpush1.msra.mxu0 0.0
        %708 = vmatprep.subr.mxu0 0.0
        %709 = vmatpush1.msra.mxu0 0.0
        %710 = vmatprep.subr.mxu0 0.0
        %711 = vmatpush1.msra.mxu0 0.0
        %712 = vmatprep.subr.mxu0 0.0
        %713 = vmatpush1.msra.mxu0 0.0
        %714 = vmatprep.subr.mxu0 0.0
        %715 = vmatpush1.msra.mxu0 0.0
        %716 = vmatprep.subr.mxu0 0.0
        %717 = vmatpush1.msra.mxu0 0.0
        %718 = vmatprep.mubr.f32.mxu0 0.0
        %719 = vmatmul.mubr.f32.gmra.mrb[0].mxu0 %v652
        %v720 = vpop.f32.mrb[0].mxu0
        %v721 = vadd.f32 %v649, %v720
        %v722 = vpop.f32.mrb[0].mxu0
        %723 = vdwg.mxu0
        %v724 = vtanh.pop %v721
        %v725 = vstv %s648
        %vm726 = vcmp.eq.s32.totalorder %v637, %v725
        %v727 = vsel %vm726, %v724, %v647
        %v728 = vld [vmem:[#allocation2 + $0x2] sm:$0x3]
        %v730 = vsel %vm650, %v724, 0
        %732 = vmatprep.subr.mxu0 0.0
        %733 = vmatpush1.msra.mxu0 %v638
        %734 = vmatprep.subr.mxu0 0.0
        %735 = vmatpush1.msra.mxu0 %v639
        %736 = vmatprep.subr.mxu0 0.0
        %737 = vmatpush1.msra.mxu0 %v640
        %738 = vmatprep.subr.mxu0 0.0
        %739 = vmatpush1.msra.mxu0 %v641
        %740 = vmatprep.subr.mxu0 0.0
        %741 = vmatpush1.msra.mxu0 %v642
        %742 = vmatprep.subr.mxu0 0.0
        %743 = vmatpush1.msra.mxu0 %v643
        %744 = vmatprep.subr.mxu0 0.0
        %745 = vmatpush1.msra.mxu0 %v644
        %746 = vmatprep.subr.mxu0 0.0
        %747 = vmatpush1.msra.mxu0 %v645
        %748 = vmatprep.subr.mxu0 0.0
        %749 = vmatpush1.msra.mxu0 0.0
        %750 = vmatprep.subr.mxu0 0.0
        %751 = vmatpush1.msra.mxu0 0.0
        %752 = vmatprep.subr.mxu0 0.0
        %753 = vmatpush1.msra.mxu0 0.0
        %754 = vmatprep.subr.mxu0 0.0
        %755 = vmatpush1.msra.mxu0 0.0
        %756 = vmatprep.subr.mxu0 0.0
        %757 = vmatpush1.msra.mxu0 0.0
        %758 = vmatprep.subr.mxu0 0.0
        %759 = vmatpush1.msra.mxu0 0.0
        %760 = vmatprep.subr.mxu0 0.0
        %761 = vmatpush1.msra.mxu0 0.0
        %762 = vmatprep.subr.mxu0 0.0
        %763 = vmatpush1.msra.mxu0 0.0
        %764 = vmatprep.subr.mxu0 0.0
        %765 = vmatpush1.msra.mxu0 0.0
        %766 = vmatprep.subr.mxu0 0.0
        %767 = vmatpush1.msra.mxu0 0.0
        %768 = vmatprep.subr.mxu0 0.0
        %769 = vmatpush1.msra.mxu0 0.0
        %770 = vmatprep.subr.mxu0 0.0
        %771 = vmatpush1.msra.mxu0 0.0
        %772 = vmatprep.subr.mxu0 0.0
        %773 = vmatpush1.msra.mxu0 0.0
        %774 = vmatprep.subr.mxu0 0.0
        %775 = vmatpush1.msra.mxu0 0.0
        %776 = vmatprep.subr.mxu0 0.0
        %777 = vmatpush1.msra.mxu0 0.0
        %778 = vmatprep.subr.mxu0 0.0
        %779 = vmatpush1.msra.mxu0 0.0
        %780 = vmatprep.subr.mxu0 0.0
        %781 = vmatpush1.msra.mxu0 0.0
        %782 = vmatprep.subr.mxu0 0.0
        %783 = vmatpush1.msra.mxu0 0.0
        %784 = vmatprep.subr.mxu0 0.0
        %785 = vmatpush1.msra.mxu0 0.0
        %786 = vmatprep.subr.mxu0 0.0
        %787 = vmatpush1.msra.mxu0 0.0
        %788 = vmatprep.subr.mxu0 0.0
        %789 = vmatpush1.msra.mxu0 0.0
        %790 = vmatprep.subr.mxu0 0.0
        %791 = vmatpush1.msra.mxu0 0.0
        %792 = vmatprep.subr.mxu0 0.0
        %793 = vmatpush1.msra.mxu0 0.0
        %794 = vmatprep.subr.mxu0 0.0
        %795 = vmatpush1.msra.mxu0 0.0
        %796 = vmatprep.mubr.f32.mxu0 0.0
        %797 = vmatmul.mubr.f32.gmra.mrb[0].mxu0 %v730
        %v798 = vpop.f32.mrb[0].mxu0
        %v799 = vadd.f32 %v728, %v798
        %v800 = vpop.f32.mrb[0].mxu0
        %801 = vdwg.mxu0
        %v802 = vtanh.pop %v799
        %s803 = sadd.s32 %s648, 1
        %v804 = vstv %s803
        %vm805 = vcmp.eq.s32.totalorder %v637, %v804
        %v806 = vsel %vm805, %v802, %v727
        %v807 = vld [vmem:[#allocation2 + $0x4] sm:$0x3]
        %v809 = vsel %vm650, %v802, 0
        %811 = vmatprep.subr.mxu0 0.0
        %812 = vmatpush1.msra.mxu0 %v638
        %813 = vmatprep.subr.mxu0 0.0
        %814 = vmatpush1.msra.mxu0 %v639
        %815 = vmatprep.subr.mxu0 0.0
        %816 = vmatpush1.msra.mxu0 %v640
        %817 = vmatprep.subr.mxu0 0.0
        %818 = vmatpush1.msra.mxu0 %v641
        %819 = vmatprep.subr.mxu0 0.0
        %820 = vmatpush1.msra.mxu0 %v642
        %821 = vmatprep.subr.mxu0 0.0
        %822 = vmatpush1.msra.mxu0 %v643
        %823 = vmatprep.subr.mxu0 0.0
        %824 = vmatpush1.msra.mxu0 %v644
        %825 = vmatprep.subr.mxu0 0.0
        %826 = vmatpush1.msra.mxu0 %v645
        %827 = vmatprep.subr.mxu0 0.0
        %828 = vmatpush1.msra.mxu0 0.0
        %829 = vmatprep.subr.mxu0 0.0
        %830 = vmatpush1.msra.mxu0 0.0
        %831 = vmatprep.subr.mxu0 0.0
        %832 = vmatpush1.msra.mxu0 0.0
        %833 = vmatprep.subr.mxu0 0.0
        %834 = vmatpush1.msra.mxu0 0.0
        %835 = vmatprep.subr.mxu0 0.0
        %836 = vmatpush1.msra.mxu0 0.0
        %837 = vmatprep.subr.mxu0 0.0
        %838 = vmatpush1.msra.mxu0 0.0
        %839 = vmatprep.subr.mxu0 0.0
        %840 = vmatpush1.msra.mxu0 0.0
        %841 = vmatprep.subr.mxu0 0.0
        %842 = vmatpush1.msra.mxu0 0.0
        %843 = vmatprep.subr.mxu0 0.0
        %844 = vmatpush1.msra.mxu0 0.0
        %845 = vmatprep.subr.mxu0 0.0
        %846 = vmatpush1.msra.mxu0 0.0
        %847 = vmatprep.subr.mxu0 0.0
        %848 = vmatpush1.msra.mxu0 0.0
        %849 = vmatprep.subr.mxu0 0.0
        %850 = vmatpush1.msra.mxu0 0.0
        %851 = vmatprep.subr.mxu0 0.0
        %852 = vmatpush1.msra.mxu0 0.0
        %853 = vmatprep.subr.mxu0 0.0
        %854 = vmatpush1.msra.mxu0 0.0
        %855 = vmatprep.subr.mxu0 0.0
        %856 = vmatpush1.msra.mxu0 0.0
        %857 = vmatprep.subr.mxu0 0.0
        %858 = vmatpush1.msra.mxu0 0.0
        %859 = vmatprep.subr.mxu0 0.0
        %860 = vmatpush1.msra.mxu0 0.0
        %861 = vmatprep.subr.mxu0 0.0
        %862 = vmatpush1.msra.mxu0 0.0
        %863 = vmatprep.subr.mxu0 0.0
        %864 = vmatpush1.msra.mxu0 0.0
        %865 = vmatprep.subr.mxu0 0.0
        %866 = vmatpush1.msra.mxu0 0.0
        %867 = vmatprep.subr.mxu0 0.0
        %868 = vmatpush1.msra.mxu0 0.0
        %869 = vmatprep.subr.mxu0 0.0
        %870 = vmatpush1.msra.mxu0 0.0
        %871 = vmatprep.subr.mxu0 0.0
        %872 = vmatpush1.msra.mxu0 0.0
        %873 = vmatprep.subr.mxu0 0.0
        %874 = vmatpush1.msra.mxu0 0.0
        %875 = vmatprep.mubr.f32.mxu0 0.0
        %876 = vmatmul.mubr.f32.gmra.mrb[0].mxu0 %v809
        %v877 = vpop.f32.mrb[0].mxu0
        %v878 = vadd.f32 %v807, %v877
        %v879 = vpop.f32.mrb[0].mxu0
        %880 = vdwg.mxu0
        %v881 = vtanh.pop %v878
        %s882 = sadd.s32 %s648, 2
        %v883 = vstv %s882
        %vm884 = vcmp.eq.s32.totalorder %v637, %v883
        %v885 = vsel %vm884, %v881, %v806
        %v886 = vld [vmem:[#allocation2 + $0x6] sm:$0x3]
        %v888 = vsel %vm650, %v881, 0
        %890 = vmatprep.subr.mxu0 0.0
        %891 = vmatpush1.msra.mxu0 %v638
        %892 = vmatprep.subr.mxu0 0.0
        %893 = vmatpush1.msra.mxu0 %v639
        %894 = vmatprep.subr.mxu0 0.0
        %895 = vmatpush1.msra.mxu0 %v640
        %896 = vmatprep.subr.mxu0 0.0
        %897 = vmatpush1.msra.mxu0 %v641
        %898 = vmatprep.subr.mxu0 0.0
        %899 = vmatpush1.msra.mxu0 %v642
        %900 = vmatprep.subr.mxu0 0.0
        %901 = vmatpush1.msra.mxu0 %v643
        %902 = vmatprep.subr.mxu0 0.0
        %903 = vmatpush1.msra.mxu0 %v644
        %904 = vmatprep.subr.mxu0 0.0
        %905 = vmatpush1.msra.mxu0 %v645
        %906 = vmatprep.subr.mxu0 0.0
        %907 = vmatpush1.msra.mxu0 0.0
        %908 = vmatprep.subr.mxu0 0.0
        %909 = vmatpush1.msra.mxu0 0.0
        %910 = vmatprep.subr.mxu0 0.0
        %911 = vmatpush1.msra.mxu0 0.0
        %912 = vmatprep.subr.mxu0 0.0
        %913 = vmatpush1.msra.mxu0 0.0
        %914 = vmatprep.subr.mxu0 0.0
        %915 = vmatpush1.msra.mxu0 0.0
        %916 = vmatprep.subr.mxu0 0.0
        %917 = vmatpush1.msra.mxu0 0.0
        %918 = vmatprep.subr.mxu0 0.0
        %919 = vmatpush1.msra.mxu0 0.0
        %920 = vmatprep.subr.mxu0 0.0
        %921 = vmatpush1.msra.mxu0 0.0
        %922 = vmatprep.subr.mxu0 0.0
        %923 = vmatpush1.msra.mxu0 0.0
        %924 = vmatprep.subr.mxu0 0.0
        %925 = vmatpush1.msra.mxu0 0.0
        %926 = vmatprep.subr.mxu0 0.0
        %927 = vmatpush1.msra.mxu0 0.0
        %928 = vmatprep.subr.mxu0 0.0
        %929 = vmatpush1.msra.mxu0 0.0
        %930 = vmatprep.subr.mxu0 0.0
        %931 = vmatpush1.msra.mxu0 0.0
        %932 = vmatprep.subr.mxu0 0.0
        %933 = vmatpush1.msra.mxu0 0.0
        %934 = vmatprep.subr.mxu0 0.0
        %935 = vmatpush1.msra.mxu0 0.0
        %936 = vmatprep.subr.mxu0 0.0
        %937 = vmatpush1.msra.mxu0 0.0
        %938 = vmatprep.subr.mxu0 0.0
        %939 = vmatpush1.msra.mxu0 0.0
        %940 = vmatprep.subr.mxu0 0.0
        %941 = vmatpush1.msra.mxu0 0.0
        %942 = vmatprep.subr.mxu0 0.0
        %943 = vmatpush1.msra.mxu0 0.0
        %944 = vmatprep.subr.mxu0 0.0
        %945 = vmatpush1.msra.mxu0 0.0
        %946 = vmatprep.subr.mxu0 0.0
        %947 = vmatpush1.msra.mxu0 0.0
        %948 = vmatprep.subr.mxu0 0.0
        %949 = vmatpush1.msra.mxu0 0.0
        %950 = vmatprep.subr.mxu0 0.0
        %951 = vmatpush1.msra.mxu0 0.0
        %952 = vmatprep.subr.mxu0 0.0
        %953 = vmatpush1.msra.mxu0 0.0
        %954 = vmatprep.mubr.f32.mxu0 0.0
        %955 = vmatmul.mubr.f32.gmra.mrb[0].mxu0 %v888
        %v956 = vpop.f32.mrb[0].mxu0
        %v957 = vadd.f32 %v886, %v956
        %v958 = vpop.f32.mrb[0].mxu0
        %959 = vdwg.mxu0
        %v960 = vtanh.pop %v957
        %s961 = sadd.s32 %s648, 3
        %v962 = vstv %s961
        %vm963 = vcmp.eq.s32.totalorder %v637, %v962
        %v964 = vsel %vm963, %v960, %v885
        %vm965 = vcmask 517120
        %966 = vst.msk [vmem:[#allocation3] sm:$0x3] %vm965, %v960
        %967 = vst.msk [vmem:[#allocation4] sm:$0x3] %vm965, %v964
        %p968 = scmp.eq.s32.totalorder %s31, 1
        // Predicated region
        $region77: #{tpu_custom_call.1} parent=59 // pred_check
          %p969 = pneg %p968
        $region78: #{tpu_custom_call.1} parent=59 // pred_check_branch
          %971 = sbr.rel (%p969) target = $region80
        $region79: #{tpu_custom_call.1} parent=59 // pred_region
          %v972 = vld [vmem:[%s8] sm:$0xff]
          %v973 = vld [vmem:[%s8 + $0x8] sm:$0xff]
          %v974 = vld [vmem:[%s8 + $0x10] sm:$0xff]
          %v975 = vld [vmem:[%s8 + $0x18] sm:$0xff]
          %v976 = vld [vmem:[%s8 + $0x20] sm:$0xff]
          %v977 = vld [vmem:[%s8 + $0x28] sm:$0xff]
          %v978 = vld [vmem:[%s8 + $0x30] sm:$0xff]
          %v979 = vld [vmem:[%s8 + $0x38] sm:$0xff]
          %v980 = vld [vmem:[%s9] sm:$0x1]
          %v982 = vlaneseq
          %v983 = vshrl.u32 %v982, 7
          %v984 = vsub.s32 0, %v983
          %v985 = vrot.slane %v980, %v984
          %v988 = vsel %vm650, %v964, 0
          %990 = vmatprep.subr.mxu0 0.0
          %991 = vmatpush1.msra.mxu0 %v972
          %992 = vmatprep.subr.mxu0 0.0
          %993 = vmatpush1.msra.mxu0 %v973
          %994 = vmatprep.subr.mxu0 0.0
          %995 = vmatpush1.msra.mxu0 %v974
          %996 = vmatprep.subr.mxu0 0.0
          %997 = vmatpush1.msra.mxu0 %v975
          %998 = vmatprep.subr.mxu0 0.0
          %999 = vmatpush1.msra.mxu0 %v976
          %1000 = vmatprep.subr.mxu0 0.0
          %1001 = vmatpush1.msra.mxu0 %v977
          %1002 = vmatprep.subr.mxu0 0.0
          %1003 = vmatpush1.msra.mxu0 %v978
          %1004 = vmatprep.subr.mxu0 0.0
          %1005 = vmatpush1.msra.mxu0 %v979
          %1006 = vmatprep.subr.mxu0 0.0
          %1007 = vmatpush1.msra.mxu0 0.0
          %1008 = vmatprep.subr.mxu0 0.0
          %1009 = vmatpush1.msra.mxu0 0.0
          %1010 = vmatprep.subr.mxu0 0.0
          %1011 = vmatpush1.msra.mxu0 0.0
          %1012 = vmatprep.subr.mxu0 0.0
          %1013 = vmatpush1.msra.mxu0 0.0
          %1014 = vmatprep.subr.mxu0 0.0
          %1015 = vmatpush1.msra.mxu0 0.0
          %1016 = vmatprep.subr.mxu0 0.0
          %1017 = vmatpush1.msra.mxu0 0.0
          %1018 = vmatprep.subr.mxu0 0.0
          %1019 = vmatpush1.msra.mxu0 0.0
          %1020 = vmatprep.subr.mxu0 0.0
          %1021 = vmatpush1.msra.mxu0 0.0
          %1022 = vmatprep.subr.mxu0 0.0
          %1023 = vmatpush1.msra.mxu0 0.0
          %1024 = vmatprep.subr.mxu0 0.0
          %1025 = vmatpush1.msra.mxu0 0.0
          %1026 = vmatprep.subr.mxu0 0.0
          %1027 = vmatpush1.msra.mxu0 0.0
          %1028 = vmatprep.subr.mxu0 0.0
          %1029 = vmatpush1.msra.mxu0 0.0
          %1030 = vmatprep.subr.mxu0 0.0
          %1031 = vmatpush1.msra.mxu0 0.0
          %1032 = vmatprep.subr.mxu0 0.0
          %1033 = vmatpush1.msra.mxu0 0.0
          %1034 = vmatprep.subr.mxu0 0.0
          %1035 = vmatpush1.msra.mxu0 0.0
          %1036 = vmatprep.subr.mxu0 0.0
          %1037 = vmatpush1.msra.mxu0 0.0
          %1038 = vmatprep.subr.mxu0 0.0
          %1039 = vmatpush1.msra.mxu0 0.0
          %1040 = vmatprep.subr.mxu0 0.0
          %1041 = vmatpush1.msra.mxu0 0.0
          %1042 = vmatprep.subr.mxu0 0.0
          %1043 = vmatpush1.msra.mxu0 0.0
          %1044 = vmatprep.subr.mxu0 0.0
          %1045 = vmatpush1.msra.mxu0 0.0
          %1046 = vmatprep.subr.mxu0 0.0
          %1047 = vmatpush1.msra.mxu0 0.0
          %1048 = vmatprep.subr.mxu0 0.0
          %1049 = vmatpush1.msra.mxu0 0.0
          %1050 = vmatprep.subr.mxu0 0.0
          %1051 = vmatpush1.msra.mxu0 0.0
          %1052 = vmatprep.subr.mxu0 0.0
          %1053 = vmatpush1.msra.mxu0 0.0
          %1054 = vmatprep.mubr.f32.mxu0 0.0
          %1055 = vmatmul.mubr.f32.gmra.mrb[0].mxu0 %v988
          %v1056 = vpop.f32.mrb[0].mxu0
          %v1057 = vadd.f32 %v985, %v1056
          %v1058 = vpop.f32.mrb[0].mxu0
          %1059 = vdwg.mxu0
          %vm1060 = vcmask 25600
          %1061 = vst.msk [vmem:[#allocation11] sm:$0x3] %vm1060, %v1057
          %vm1062 = vcmask 254976
          %1063 = vst.msk [vmem:[#allocation12] sm:$0x3] %vm1062, %v960
          %1065 = vrot.lane.b32.xlu0 %v960, 96
          %v1066 = vpop.permute.xlu0 %1065
          %s1068 = scalar_lea.vmem [#allocation12], 2
          %1069 = vst.msk [vmem:[%s1068] sm:$0x3] %vm1062, %v1066
        $region80: #{tpu_custom_call.1} parent=59 // pred_fallthru
          _
        // Predicated region
        $region81: #{tpu_custom_call.1} parent=59 // pred_check
          %p1070 = pneg %p264
        $region82: #{tpu_custom_call.1} parent=59 // pred_check_branch
          %1072 = sbr.rel (%p1070) target = $region84
        $region83: #{tpu_custom_call.1} parent=59 // pred_region
          %s1074 = ssub.s32 32, 32
          %1075 = vsyncadd [#allocation7], %s1074
          %s1077 = sshll.u32 [#allocation11], 4
          %s1078 = int_to_ptr.vmem [resolvable:$true] %s1077
          %1080 = dma.vmem_to_hbm [thread:$0]  %s1078, 32, %s10, [#allocation7]
        $region84: #{tpu_custom_call.1} parent=59 // pred_fallthru
          _
        // Predicated region
        $region85: #{tpu_custom_call.1} parent=59 // pred_check
          %p1081 = pneg %p285
        $region86: #{tpu_custom_call.1} parent=59 // pred_check_branch
          %1083 = sbr.rel (%p1081) target = $region88
        $region87: #{tpu_custom_call.1} parent=59 // pred_region
          %s1085 = ssub.s32 64, 64
          %1086 = vsyncadd [#allocation13], %s1085
          %s1087 = sshll.u32 [#allocation12], 4
          %s1088 = int_to_ptr.vmem [resolvable:$true] %s1087
          %1093 = dma.vmem_to_hbm [thread:$0]  %s1088, 64, %s11, [#allocation13], 32, 32, 2
        $region88: #{tpu_custom_call.1} parent=59 // pred_fallthru
          _
        // Predicated region
        $region89: #{tpu_custom_call.1} parent=59 // pred_check
          %p1094 = pneg %p264
        $region90: #{tpu_custom_call.1} parent=59 // pred_check_branch
          %1096 = sbr.rel (%p1094) target = $region92
        $region91: #{tpu_custom_call.1} parent=59 // pred_region
          %1097 = dma.done [#allocation7], 32
        $region92: #{tpu_custom_call.1} parent=59 // pred_fallthru
          _
        // Predicated region
        $region93: #{tpu_custom_call.1} parent=59 // pred_check
          %p1098 = pneg %p285
        $region94: #{tpu_custom_call.1} parent=59 // pred_check_branch
          %1100 = sbr.rel (%p1098) target = $region96
        $region95: #{tpu_custom_call.1} parent=59 // pred_region
          %1101 = dma.done [#allocation13], 64
        $region96: #{tpu_custom_call.1} parent=59 // pred_fallthru
          _
      $region60: #{tpu_custom_call.1} parent=5 // pred_fallthru
        _
      %p1102 = scmp.le.s32.totalorder 2, %s26
      // Predicated region
      $region97: #{tpu_custom_call.1} parent=5 // pred_check
        %p1103 = pneg %p1102
      $region98: #{tpu_custom_call.1} parent=5 // pred_check_branch
        %1105 = sbr.rel (%p1103) target = $region100
      $region99: #{tpu_custom_call.1} parent=5 // pred_region
        %s1106 = ssub.s32 %s26, 2
      $region100: #{tpu_custom_call.1} parent=5 // pred_fallthru
        _
    $region6: #{tpu_custom_call.1} parent=1 // loop_footer
      %s30 = sadd.s32 1, %s26
    $region7: #{tpu_custom_call.1} parent=1 // loop_footer_branch
      %25 = sbr.rel target = $region3
    $region8: #{tpu_custom_call.1} parent=1 // loop_exit
      _
    %1107 = vsyncpa [#allocation6], 1
    %s1108 = scalar_lea.sflag [#allocation6], 1
    %1109 = vsyncpa %s1108, 1
    %1110 = vsyncpa [#allocation9], 1
    %s1111 = scalar_lea.sflag [#allocation9], 1
    %1112 = vsyncpa %s1111, 1
    %1113 = vsyncpa [#allocation7], 1
    %s1114 = scalar_lea.sflag [#allocation7], 1
    %1115 = vsyncpa %s1114, 1
    %1116 = vsyncpa [#allocation13], 1

</llo_original>
